<compile_context>
chip_gen: v5e
topology: v5e:2x2
jax: 0.10.0
libtpu: 0.0.40
codegen_flags: <defaults>
</compile_context>

<pallas_src>
import functools

import jax
import jax.numpy as jnp
from jax.experimental import pallas as pl
from jax.experimental.pallas import tpu as pltpu

EPS = 1e-5  # BatchNorm2d default eps


# ----------------------------- Fused Pallas kernel -------------------------- #

def _fused_kernel(mask_ref, x_ref, w1_ref, b1_ref, w2_ref, b2_ref,
                  w3_ref, b3_ref, o_ref, *, C, MID, H, W, NB):
    """Fused OutConvDistance forward for a block of NB batch elements.

    mask_ref: (8, H*W)      VMEM  per-tap validity masks (1.0 = in bounds)
    x_ref   : (C, NB, H*W)  VMEM  input block, channels-first, spatial flat
    w1_ref  : (9*C*MID,)    SMEM  conv1 weight * BN1 scale, HWIO flattened
    b1_ref  : (MID,)        SMEM  folded BN1 bias (conv bias folded in)
    w2_ref  : (9*MID*MID,)  SMEM  conv2 weight * BN2 scale, HWIO flattened
    b2_ref  : (MID,)        SMEM  folded BN2 bias
    w3_ref  : (MID,)        SMEM  1x1 conv weight
    b3_ref  : (1,)          SMEM  1x1 conv bias
    o_ref   : (NB, H*W)     VMEM  sigmoid output (sublane- and lane-dense)
    """
    HW = H * W

    x = x_ref[...]            # single dense load of the whole (C, NB, HW) block
    masks_v = mask_ref[...]   # (8, HW)

    # Hoisted (traced once) broadcast of the 8 edge masks to slab shape.
    tap_masks = [jnp.broadcast_to(masks_v[i:i + 1, :], (NB, HW)) for i in range(8)]

    def conv3x3_bias_relu(rows, cin, cout, w_ref, b_ref):
        # rows: list of `cin` arrays of shape (NB, HW). Returns `cout` slabs.
        # BN scale is already folded into w_ref on the host.
        accs = [jnp.zeros((NB, HW), jnp.float32) for _ in range(cout)]
        tap_i = 0
        for dy in (-1, 0, 1):
            for dx in (-1, 0, 1):
                # shifted[i] = x_flat[i + dy*W + dx]  (wrap-around fixed by mask)
                shift = (-(dy * W + dx)) % HW
                if shift == 0:
                    shifted = rows
                else:
                    shifted = [pltpu.roll(r, shift=shift, axis=1) for r in rows]
                if dy == 0 and dx == 0:
                    mask = None               # center tap: always valid
                else:
                    mask = tap_masks[tap_i]
                    tap_i += 1
                base = ((dy + 1) * 3 + (dx + 1)) * cin * cout  # HWIO flat offset
                for co in range(cout):
                    contrib = w_ref[base + co] * shifted[0]
                    for ci in range(1, cin):
                        contrib = contrib + w_ref[base + ci * cout + co] * shifted[ci]
                    if mask is not None:
                        contrib = contrib * mask
                    accs[co] = accs[co] + contrib
        # Folded BN bias + ReLU (scalar broadcast per output channel).
        return [jnp.maximum(accs[co] + b_ref[co], 0.0) for co in range(cout)]

    x_rows = [x[c] for c in range(C)]         # channel slabs (NB, HW)

    h1 = conv3x3_bias_relu(x_rows, C, MID, w1_ref, b1_ref)
    h2 = conv3x3_bias_relu(h1, MID, MID, w2_ref, b2_ref)

    # 1x1 conv + sigmoid, written as one dense (NB, HW) slab.
    y = w3_ref[0] * h2[0]
    for c in range(1, MID):
        y = y + w3_ref[c] * h2[c]
    o_ref[...] = jax.nn.sigmoid(y + b3_ref[0])


# ------------------------------ Host-side wrapper ---------------------------- #

def _fold_bn(gamma, beta, mean, var, conv_bias):
    # Eval-mode BN with the conv bias folded in:
    #   BN(conv + b) = scale*conv + (beta + scale*(b - mean))
    scale = gamma / jnp.sqrt(var + EPS)
    bias = beta + scale * (conv_bias - mean)
    return scale.astype(jnp.float32), bias.astype(jnp.float32)


def _edge_masks(H, W):
    """(8, H*W) float masks for the 8 non-center 3x3 taps, in (dy, dx) order."""
    HW = H * W
    flat = jnp.arange(HW, dtype=jnp.int32)
    col = flat % W
    row = flat // W
    rows = []
    for dy in (-1, 0, 1):
        for dx in (-1, 0, 1):
            if dy == 0 and dx == 0:
                continue
            ok = ((row + dy >= 0) & (row + dy < H) &
                  (col + dx >= 0) & (col + dx < W))
            rows.append(ok.astype(jnp.float32))
    return jnp.stack(rows)


def out_conv_distance(x_nchw, p, nb=8):
    """Forward pass matching OutConvDistance. Input NCHW, output NCHW (N,1,H,W)."""
    N, C, H, W = x_nchw.shape
    MID = C // 2
    HW = H * W

    # Pack NB batch elements per grid step onto the sublane axis.  NB=8 fills
    # the 8 sublanes; for N >= 16 the grid keeps >= 2 steps so v7x's two
    # TensorCores both get work.  Small batches just use NB = N (no padding).
    NB = nb if N >= nb else N
    grid_n = pl.cdiv(N, NB)
    Np = grid_n * NB

    x = x_nchw.astype(jnp.float32).reshape(N, C, HW)
    if Np != N:
        x = jnp.pad(x, ((0, Np - N), (0, 0), (0, 0)))
    # (grid_n, NB, C, HW) -> (grid_n, C, NB, HW): per-channel slabs are (NB, HW).
    x = x.reshape(grid_n, NB, C, HW).transpose(0, 2, 1, 3)

    s1, b1 = _fold_bn(p["g1"], p["be1"], p["m1"], p["v1"], p["b1"])
    s2, b2 = _fold_bn(p["g2"], p["be2"], p["m2"], p["v2"], p["b2"])
    # Fold BN scale into the conv weights on the host (pure preprocessing).
    w1f = (p["w1"].astype(jnp.float32) * s1[None, None, None, :]).reshape(-1)
    w2f = (p["w2"].astype(jnp.float32) * s2[None, None, None, :]).reshape(-1)
    w3f = p["w3"].astype(jnp.float32).reshape(-1)
    b3f = p["b3"].astype(jnp.float32).reshape(-1)
    masks = _edge_masks(H, W)

    kern = functools.partial(_fused_kernel, C=C, MID=MID, H=H, W=W, NB=NB)
    smem = pl.BlockSpec(memory_space=pltpu.MemorySpace.SMEM)
    out = pl.pallas_call(
        kern,
        out_shape=jax.ShapeDtypeStruct((grid_n, NB, HW), jnp.float32),
        grid=(grid_n,),
        in_specs=[
            pl.BlockSpec((8, HW), lambda n: (0, 0)),                 # edge masks (resident)
            pl.BlockSpec((None, C, NB, HW), lambda n: (n, 0, 0, 0)),  # x block
            smem, smem,                                               # w1*s1, b1
            smem, smem,                                               # w2*s2, b2
            smem, smem,                                               # w3, b3
        ],
        out_specs=pl.BlockSpec((None, NB, HW), lambda n: (n, 0, 0)),
        compiler_params=pltpu.CompilerParams(
            dimension_semantics=("parallel",)),   # v7x: 2 TCs split the batch blocks
    )(masks, x, w1f, b1, w2f, b2, w3f, b3f)

    out = out.reshape(Np, HW)[:N]
    return out.reshape(N, 1, H, W)   # free reshape: lane axis is already W-major


# ------------------------------ Module emulation ----------------------------- #

def init_params(key, in_channels):
    """Deterministic synthetic parameters (no checkpoint load)."""
    mid = in_channels // 2
    ks = jax.random.split(key, 14)

    def wnorm(k, shape, fan_in):
        return jax.random.normal(k, shape, jnp.float32) / jnp.sqrt(float(fan_in))

    p = dict(
        w1=wnorm(ks[0], (3, 3, in_channels, mid), 9 * in_channels),
        b1=0.1 * jax.random.normal(ks[1], (mid,), jnp.float32),
        g1=1.0 + 0.1 * jax.random.normal(ks[2], (mid,), jnp.float32),
        be1=0.1 * jax.random.normal(ks[3], (mid,), jnp.float32),
        m1=0.1 * jax.random.normal(ks[4], (mid,), jnp.float32),
        v1=1.0 + 0.1 * jax.random.uniform(ks[5], (mid,), jnp.float32),
        w2=wnorm(ks[6], (3, 3, mid, mid), 9 * mid),
        b2=0.1 * jax.random.normal(ks[7], (mid,), jnp.float32),
        g2=1.0 + 0.1 * jax.random.normal(ks[8], (mid,), jnp.float32),
        be2=0.1 * jax.random.normal(ks[9], (mid,), jnp.float32),
        m2=0.1 * jax.random.normal(ks[10], (mid,), jnp.float32),
        v2=1.0 + 0.1 * jax.random.uniform(ks[11], (mid,), jnp.float32),
        w3=wnorm(ks[12], (mid, 1), mid),
        b3=0.1 * jax.random.normal(ks[13], (1,), jnp.float32),
    )
    return p


# ------------------------------ Pure-JAX reference --------------------------- #

def ref_forward(x_nchw, p):
    x = jnp.transpose(x_nchw, (0, 2, 3, 1)).astype(jnp.float32)

    def conv(x, w, b):
        y = jax.lax.conv_general_dilated(
            x, w, window_strides=(1, 1), padding="SAME",
            dimension_numbers=("NHWC", "HWIO", "NHWC"),
            precision=jax.lax.Precision.HIGHEST)
        return y + b

    def bn(x, g, be, m, v):
        return g * (x - m) / jnp.sqrt(v + EPS) + be

    h = jax.nn.relu(bn(conv(x, p["w1"], p["b1"]),
                       p["g1"], p["be1"], p["m1"], p["v1"]))
    h = jax.nn.relu(bn(conv(h, p["w2"], p["b2"]),
                       p["g2"], p["be2"], p["m2"], p["v2"]))
    w3 = p["w3"].reshape(1, 1, -1, 1)
    out = jax.nn.sigmoid(conv(h, w3, p["b3"]))
    return jnp.transpose(out, (0, 3, 1, 2))


# ----------------------------------- Main ------------------------------------ #

if __name__ == "__main__":
    key = jax.random.PRNGKey(0)
    k_params, k_x = jax.random.split(key)

    N, C, H, W = 2, 4, 16, 16          # in_channels=4 -> mid_channels=2
    x = jax.random.normal(k_x, (N, C, H, W), jnp.float32)
    params = init_params(k_params, C)

    out = out_conv_distance(x, params)
    out = jax.block_until_ready(out)

    ref = jax.block_until_ready(ref_forward(x, params))
    assert out.shape == (N, 1, H, W)
    assert jnp.allclose(out, ref, rtol=1e-3, atol=5e-5), (
        float(jnp.max(jnp.abs(out - ref))))

    print("KERNEL_OK")
</pallas_src>

<mosaic_0001>
module attributes {stable_mosaic.version = 11 : i64} {
  func.func @_fused_kernel(%arg0: i32, %arg1: memref<8x256xf32, #tpu.memory_space<vmem>>, %arg2: memref<1x4x2x256xf32, #tpu.memory_space<vmem>>, %arg3: memref<72xf32, #tpu.memory_space<smem>>, %arg4: memref<2xf32, #tpu.memory_space<smem>>, %arg5: memref<36xf32, #tpu.memory_space<smem>>, %arg6: memref<2xf32, #tpu.memory_space<smem>>, %arg7: memref<2xf32, #tpu.memory_space<smem>>, %arg8: memref<1xf32, #tpu.memory_space<smem>>, %arg9: memref<1x2x256xf32, #tpu.memory_space<vmem>>) attributes {dimension_semantics = [#tpu.dimension_semantics<parallel>], iteration_bounds = array<i64: 1>, scalar_prefetch = 0 : i64, scratch_operands = 0 : i64, tpu.core_type = #tpu.core_type<tc>, window_params = [{pipeline_mode = #tpu.pipeline_mode<synchronous>, transform_indices = @transform_0, window_bounds = array<i64: 8, 256>}, {transform_indices = @transform_1, window_bounds = array<i64: 1, 4, 2, 256>}, {transform_indices = @transform_2, window_bounds = array<i64: 72>}, {transform_indices = @transform_3, window_bounds = array<i64: 2>}, {transform_indices = @transform_4, window_bounds = array<i64: 36>}, {transform_indices = @transform_5, window_bounds = array<i64: 2>}, {transform_indices = @transform_6, window_bounds = array<i64: 2>}, {transform_indices = @transform_7, window_bounds = array<i64: 1>}, {transform_indices = @transform_8, window_bounds = array<i64: 1, 2, 256>}]} {
    %c0 = arith.constant 0 : index
    %c0_0 = arith.constant 0 : index
    %c0_1 = arith.constant 0 : index
    %c0_2 = arith.constant 0 : index
    %0 = vector.load %arg2[%c0, %c0_0, %c0_1, %c0_2] : memref<1x4x2x256xf32, #tpu.memory_space<vmem>>, vector<1x4x2x256xf32>
    %1 = vector.shape_cast %0 : vector<1x4x2x256xf32> to vector<4x2x256xf32>
    %c0_3 = arith.constant 0 : index
    %c0_4 = arith.constant 0 : index
    %2 = vector.load %arg1[%c0_3, %c0_4] : memref<8x256xf32, #tpu.memory_space<vmem>>, vector<8x256xf32>
    %3 = vector.extract_strided_slice %2 {offsets = [0, 0], sizes = [1, 256], strides = [1, 1]} : vector<8x256xf32> to vector<1x256xf32>
    %4 = vector.shape_cast %3 : vector<1x256xf32> to vector<1x256xf32>
    %5 = vector.broadcast %4 : vector<1x256xf32> to vector<2x256xf32>
    %6 = vector.extract_strided_slice %2 {offsets = [1, 0], sizes = [1, 256], strides = [1, 1]} : vector<8x256xf32> to vector<1x256xf32>
    %7 = vector.shape_cast %6 : vector<1x256xf32> to vector<1x256xf32>
    %8 = vector.broadcast %7 : vector<1x256xf32> to vector<2x256xf32>
    %9 = vector.extract_strided_slice %2 {offsets = [2, 0], sizes = [1, 256], strides = [1, 1]} : vector<8x256xf32> to vector<1x256xf32>
    %10 = vector.shape_cast %9 : vector<1x256xf32> to vector<1x256xf32>
    %11 = vector.broadcast %10 : vector<1x256xf32> to vector<2x256xf32>
    %12 = vector.extract_strided_slice %2 {offsets = [3, 0], sizes = [1, 256], strides = [1, 1]} : vector<8x256xf32> to vector<1x256xf32>
    %13 = vector.shape_cast %12 : vector<1x256xf32> to vector<1x256xf32>
    %14 = vector.broadcast %13 : vector<1x256xf32> to vector<2x256xf32>
    %15 = vector.extract_strided_slice %2 {offsets = [4, 0], sizes = [1, 256], strides = [1, 1]} : vector<8x256xf32> to vector<1x256xf32>
    %16 = vector.shape_cast %15 : vector<1x256xf32> to vector<1x256xf32>
    %17 = vector.broadcast %16 : vector<1x256xf32> to vector<2x256xf32>
    %18 = vector.extract_strided_slice %2 {offsets = [5, 0], sizes = [1, 256], strides = [1, 1]} : vector<8x256xf32> to vector<1x256xf32>
    %19 = vector.shape_cast %18 : vector<1x256xf32> to vector<1x256xf32>
    %20 = vector.broadcast %19 : vector<1x256xf32> to vector<2x256xf32>
    %21 = vector.extract_strided_slice %2 {offsets = [6, 0], sizes = [1, 256], strides = [1, 1]} : vector<8x256xf32> to vector<1x256xf32>
    %22 = vector.shape_cast %21 : vector<1x256xf32> to vector<1x256xf32>
    %23 = vector.broadcast %22 : vector<1x256xf32> to vector<2x256xf32>
    %24 = vector.extract_strided_slice %2 {offsets = [7, 0], sizes = [1, 256], strides = [1, 1]} : vector<8x256xf32> to vector<1x256xf32>
    %25 = vector.shape_cast %24 : vector<1x256xf32> to vector<1x256xf32>
    %26 = vector.broadcast %25 : vector<1x256xf32> to vector<2x256xf32>
    %27 = vector.extract_strided_slice %1 {offsets = [0, 0, 0], sizes = [1, 2, 256], strides = [1, 1, 1]} : vector<4x2x256xf32> to vector<1x2x256xf32>
    %28 = vector.shape_cast %27 : vector<1x2x256xf32> to vector<2x256xf32>
    %29 = vector.extract_strided_slice %1 {offsets = [1, 0, 0], sizes = [1, 2, 256], strides = [1, 1, 1]} : vector<4x2x256xf32> to vector<1x2x256xf32>
    %30 = vector.shape_cast %29 : vector<1x2x256xf32> to vector<2x256xf32>
    %31 = vector.extract_strided_slice %1 {offsets = [2, 0, 0], sizes = [1, 2, 256], strides = [1, 1, 1]} : vector<4x2x256xf32> to vector<1x2x256xf32>
    %32 = vector.shape_cast %31 : vector<1x2x256xf32> to vector<2x256xf32>
    %33 = vector.extract_strided_slice %1 {offsets = [3, 0, 0], sizes = [1, 2, 256], strides = [1, 1, 1]} : vector<4x2x256xf32> to vector<1x2x256xf32>
    %34 = vector.shape_cast %33 : vector<1x2x256xf32> to vector<2x256xf32>
    %cst = arith.constant 0.000000e+00 : f32
    %35 = vector.broadcast %cst : f32 to vector<2x256xf32>
    %cst_5 = arith.constant 0.000000e+00 : f32
    %36 = vector.broadcast %cst_5 : f32 to vector<2x256xf32>
    %c17_i32 = arith.constant 17 : i32
    %37 = tpu.dynamic_rotate %28 by %c17_i32 dim 1 : vector<2x256xf32>, i32 -> vector<2x256xf32>
    %c17_i32_6 = arith.constant 17 : i32
    %38 = tpu.dynamic_rotate %30 by %c17_i32_6 dim 1 : vector<2x256xf32>, i32 -> vector<2x256xf32>
    %c17_i32_7 = arith.constant 17 : i32
    %39 = tpu.dynamic_rotate %32 by %c17_i32_7 dim 1 : vector<2x256xf32>, i32 -> vector<2x256xf32>
    %c17_i32_8 = arith.constant 17 : i32
    %40 = tpu.dynamic_rotate %34 by %c17_i32_8 dim 1 : vector<2x256xf32>, i32 -> vector<2x256xf32>
    %c0_9 = arith.constant 0 : index
    %41 = memref.load %arg3[%c0_9] : memref<72xf32, #tpu.memory_space<smem>>
    %42 = vector.broadcast %41 : f32 to vector<2x256xf32>
    %43 = arith.mulf %42, %37 : vector<2x256xf32>
    %c2 = arith.constant 2 : index
    %44 = memref.load %arg3[%c2] : memref<72xf32, #tpu.memory_space<smem>>
    %45 = vector.broadcast %44 : f32 to vector<2x256xf32>
    %46 = arith.mulf %45, %38 : vector<2x256xf32>
    %47 = arith.addf %43, %46 : vector<2x256xf32>
    %c4 = arith.constant 4 : index
    %48 = memref.load %arg3[%c4] : memref<72xf32, #tpu.memory_space<smem>>
    %49 = vector.broadcast %48 : f32 to vector<2x256xf32>
    %50 = arith.mulf %49, %39 : vector<2x256xf32>
    %51 = arith.addf %47, %50 : vector<2x256xf32>
    %c6 = arith.constant 6 : index
    %52 = memref.load %arg3[%c6] : memref<72xf32, #tpu.memory_space<smem>>
    %53 = vector.broadcast %52 : f32 to vector<2x256xf32>
    %54 = arith.mulf %53, %40 : vector<2x256xf32>
    %55 = arith.addf %51, %54 : vector<2x256xf32>
    %56 = arith.mulf %55, %5 : vector<2x256xf32>
    %57 = arith.addf %35, %56 : vector<2x256xf32>
    %c1 = arith.constant 1 : index
    %58 = memref.load %arg3[%c1] : memref<72xf32, #tpu.memory_space<smem>>
    %59 = vector.broadcast %58 : f32 to vector<2x256xf32>
    %60 = arith.mulf %59, %37 : vector<2x256xf32>
    %c3 = arith.constant 3 : index
    %61 = memref.load %arg3[%c3] : memref<72xf32, #tpu.memory_space<smem>>
    %62 = vector.broadcast %61 : f32 to vector<2x256xf32>
    %63 = arith.mulf %62, %38 : vector<2x256xf32>
    %64 = arith.addf %60, %63 : vector<2x256xf32>
    %c5 = arith.constant 5 : index
    %65 = memref.load %arg3[%c5] : memref<72xf32, #tpu.memory_space<smem>>
    %66 = vector.broadcast %65 : f32 to vector<2x256xf32>
    %67 = arith.mulf %66, %39 : vector<2x256xf32>
    %68 = arith.addf %64, %67 : vector<2x256xf32>
    %c7 = arith.constant 7 : index
    %69 = memref.load %arg3[%c7] : memref<72xf32, #tpu.memory_space<smem>>
    %70 = vector.broadcast %69 : f32 to vector<2x256xf32>
    %71 = arith.mulf %70, %40 : vector<2x256xf32>
    %72 = arith.addf %68, %71 : vector<2x256xf32>
    %73 = arith.mulf %72, %5 : vector<2x256xf32>
    %74 = arith.addf %36, %73 : vector<2x256xf32>
    %c16_i32 = arith.constant 16 : i32
    %75 = tpu.dynamic_rotate %28 by %c16_i32 dim 1 : vector<2x256xf32>, i32 -> vector<2x256xf32>
    %c16_i32_10 = arith.constant 16 : i32
    %76 = tpu.dynamic_rotate %30 by %c16_i32_10 dim 1 : vector<2x256xf32>, i32 -> vector<2x256xf32>
    %c16_i32_11 = arith.constant 16 : i32
    %77 = tpu.dynamic_rotate %32 by %c16_i32_11 dim 1 : vector<2x256xf32>, i32 -> vector<2x256xf32>
    %c16_i32_12 = arith.constant 16 : i32
    %78 = tpu.dynamic_rotate %34 by %c16_i32_12 dim 1 : vector<2x256xf32>, i32 -> vector<2x256xf32>
    %c8 = arith.constant 8 : index
    %79 = memref.load %arg3[%c8] : memref<72xf32, #tpu.memory_space<smem>>
    %80 = vector.broadcast %79 : f32 to vector<2x256xf32>
    %81 = arith.mulf %80, %75 : vector<2x256xf32>
    %c10 = arith.constant 10 : index
    %82 = memref.load %arg3[%c10] : memref<72xf32, #tpu.memory_space<smem>>
    %83 = vector.broadcast %82 : f32 to vector<2x256xf32>
    %84 = arith.mulf %83, %76 : vector<2x256xf32>
    %85 = arith.addf %81, %84 : vector<2x256xf32>
    %c12 = arith.constant 12 : index
    %86 = memref.load %arg3[%c12] : memref<72xf32, #tpu.memory_space<smem>>
    %87 = vector.broadcast %86 : f32 to vector<2x256xf32>
    %88 = arith.mulf %87, %77 : vector<2x256xf32>
    %89 = arith.addf %85, %88 : vector<2x256xf32>
    %c14 = arith.constant 14 : index
    %90 = memref.load %arg3[%c14] : memref<72xf32, #tpu.memory_space<smem>>
    %91 = vector.broadcast %90 : f32 to vector<2x256xf32>
    %92 = arith.mulf %91, %78 : vector<2x256xf32>
    %93 = arith.addf %89, %92 : vector<2x256xf32>
    %94 = arith.mulf %93, %8 : vector<2x256xf32>
    %95 = arith.addf %57, %94 : vector<2x256xf32>
    %c9 = arith.constant 9 : index
    %96 = memref.load %arg3[%c9] : memref<72xf32, #tpu.memory_space<smem>>
    %97 = vector.broadcast %96 : f32 to vector<2x256xf32>
    %98 = arith.mulf %97, %75 : vector<2x256xf32>
    %c11 = arith.constant 11 : index
    %99 = memref.load %arg3[%c11] : memref<72xf32, #tpu.memory_space<smem>>
    %100 = vector.broadcast %99 : f32 to vector<2x256xf32>
    %101 = arith.mulf %100, %76 : vector<2x256xf32>
    %102 = arith.addf %98, %101 : vector<2x256xf32>
    %c13 = arith.constant 13 : index
    %103 = memref.load %arg3[%c13] : memref<72xf32, #tpu.memory_space<smem>>
    %104 = vector.broadcast %103 : f32 to vector<2x256xf32>
    %105 = arith.mulf %104, %77 : vector<2x256xf32>
    %106 = arith.addf %102, %105 : vector<2x256xf32>
    %c15 = arith.constant 15 : index
    %107 = memref.load %arg3[%c15] : memref<72xf32, #tpu.memory_space<smem>>
    %108 = vector.broadcast %107 : f32 to vector<2x256xf32>
    %109 = arith.mulf %108, %78 : vector<2x256xf32>
    %110 = arith.addf %106, %109 : vector<2x256xf32>
    %111 = arith.mulf %110, %8 : vector<2x256xf32>
    %112 = arith.addf %74, %111 : vector<2x256xf32>
    %c15_i32 = arith.constant 15 : i32
    %113 = tpu.dynamic_rotate %28 by %c15_i32 dim 1 : vector<2x256xf32>, i32 -> vector<2x256xf32>
    %c15_i32_13 = arith.constant 15 : i32
    %114 = tpu.dynamic_rotate %30 by %c15_i32_13 dim 1 : vector<2x256xf32>, i32 -> vector<2x256xf32>
    %c15_i32_14 = arith.constant 15 : i32
    %115 = tpu.dynamic_rotate %32 by %c15_i32_14 dim 1 : vector<2x256xf32>, i32 -> vector<2x256xf32>
    %c15_i32_15 = arith.constant 15 : i32
    %116 = tpu.dynamic_rotate %34 by %c15_i32_15 dim 1 : vector<2x256xf32>, i32 -> vector<2x256xf32>
    %c16 = arith.constant 16 : index
    %117 = memref.load %arg3[%c16] : memref<72xf32, #tpu.memory_space<smem>>
    %118 = vector.broadcast %117 : f32 to vector<2x256xf32>
    %119 = arith.mulf %118, %113 : vector<2x256xf32>
    %c18 = arith.constant 18 : index
    %120 = memref.load %arg3[%c18] : memref<72xf32, #tpu.memory_space<smem>>
    %121 = vector.broadcast %120 : f32 to vector<2x256xf32>
    %122 = arith.mulf %121, %114 : vector<2x256xf32>
    %123 = arith.addf %119, %122 : vector<2x256xf32>
    %c20 = arith.constant 20 : index
    %124 = memref.load %arg3[%c20] : memref<72xf32, #tpu.memory_space<smem>>
    %125 = vector.broadcast %124 : f32 to vector<2x256xf32>
    %126 = arith.mulf %125, %115 : vector<2x256xf32>
    %127 = arith.addf %123, %126 : vector<2x256xf32>
    %c22 = arith.constant 22 : index
    %128 = memref.load %arg3[%c22] : memref<72xf32, #tpu.memory_space<smem>>
    %129 = vector.broadcast %128 : f32 to vector<2x256xf32>
    %130 = arith.mulf %129, %116 : vector<2x256xf32>
    %131 = arith.addf %127, %130 : vector<2x256xf32>
    %132 = arith.mulf %131, %11 : vector<2x256xf32>
    %133 = arith.addf %95, %132 : vector<2x256xf32>
    %c17 = arith.constant 17 : index
    %134 = memref.load %arg3[%c17] : memref<72xf32, #tpu.memory_space<smem>>
    %135 = vector.broadcast %134 : f32 to vector<2x256xf32>
    %136 = arith.mulf %135, %113 : vector<2x256xf32>
    %c19 = arith.constant 19 : index
    %137 = memref.load %arg3[%c19] : memref<72xf32, #tpu.memory_space<smem>>
    %138 = vector.broadcast %137 : f32 to vector<2x256xf32>
    %139 = arith.mulf %138, %114 : vector<2x256xf32>
    %140 = arith.addf %136, %139 : vector<2x256xf32>
    %c21 = arith.constant 21 : index
    %141 = memref.load %arg3[%c21] : memref<72xf32, #tpu.memory_space<smem>>
    %142 = vector.broadcast %141 : f32 to vector<2x256xf32>
    %143 = arith.mulf %142, %115 : vector<2x256xf32>
    %144 = arith.addf %140, %143 : vector<2x256xf32>
    %c23 = arith.constant 23 : index
    %145 = memref.load %arg3[%c23] : memref<72xf32, #tpu.memory_space<smem>>
    %146 = vector.broadcast %145 : f32 to vector<2x256xf32>
    %147 = arith.mulf %146, %116 : vector<2x256xf32>
    %148 = arith.addf %144, %147 : vector<2x256xf32>
    %149 = arith.mulf %148, %11 : vector<2x256xf32>
    %150 = arith.addf %112, %149 : vector<2x256xf32>
    %c1_i32 = arith.constant 1 : i32
    %151 = tpu.dynamic_rotate %28 by %c1_i32 dim 1 : vector<2x256xf32>, i32 -> vector<2x256xf32>
    %c1_i32_16 = arith.constant 1 : i32
    %152 = tpu.dynamic_rotate %30 by %c1_i32_16 dim 1 : vector<2x256xf32>, i32 -> vector<2x256xf32>
    %c1_i32_17 = arith.constant 1 : i32
    %153 = tpu.dynamic_rotate %32 by %c1_i32_17 dim 1 : vector<2x256xf32>, i32 -> vector<2x256xf32>
    %c1_i32_18 = arith.constant 1 : i32
    %154 = tpu.dynamic_rotate %34 by %c1_i32_18 dim 1 : vector<2x256xf32>, i32 -> vector<2x256xf32>
    %c24 = arith.constant 24 : index
    %155 = memref.load %arg3[%c24] : memref<72xf32, #tpu.memory_space<smem>>
    %156 = vector.broadcast %155 : f32 to vector<2x256xf32>
    %157 = arith.mulf %156, %151 : vector<2x256xf32>
    %c26 = arith.constant 26 : index
    %158 = memref.load %arg3[%c26] : memref<72xf32, #tpu.memory_space<smem>>
    %159 = vector.broadcast %158 : f32 to vector<2x256xf32>
    %160 = arith.mulf %159, %152 : vector<2x256xf32>
    %161 = arith.addf %157, %160 : vector<2x256xf32>
    %c28 = arith.constant 28 : index
    %162 = memref.load %arg3[%c28] : memref<72xf32, #tpu.memory_space<smem>>
    %163 = vector.broadcast %162 : f32 to vector<2x256xf32>
    %164 = arith.mulf %163, %153 : vector<2x256xf32>
    %165 = arith.addf %161, %164 : vector<2x256xf32>
    %c30 = arith.constant 30 : index
    %166 = memref.load %arg3[%c30] : memref<72xf32, #tpu.memory_space<smem>>
    %167 = vector.broadcast %166 : f32 to vector<2x256xf32>
    %168 = arith.mulf %167, %154 : vector<2x256xf32>
    %169 = arith.addf %165, %168 : vector<2x256xf32>
    %170 = arith.mulf %169, %14 : vector<2x256xf32>
    %171 = arith.addf %133, %170 : vector<2x256xf32>
    %c25 = arith.constant 25 : index
    %172 = memref.load %arg3[%c25] : memref<72xf32, #tpu.memory_space<smem>>
    %173 = vector.broadcast %172 : f32 to vector<2x256xf32>
    %174 = arith.mulf %173, %151 : vector<2x256xf32>
    %c27 = arith.constant 27 : index
    %175 = memref.load %arg3[%c27] : memref<72xf32, #tpu.memory_space<smem>>
    %176 = vector.broadcast %175 : f32 to vector<2x256xf32>
    %177 = arith.mulf %176, %152 : vector<2x256xf32>
    %178 = arith.addf %174, %177 : vector<2x256xf32>
    %c29 = arith.constant 29 : index
    %179 = memref.load %arg3[%c29] : memref<72xf32, #tpu.memory_space<smem>>
    %180 = vector.broadcast %179 : f32 to vector<2x256xf32>
    %181 = arith.mulf %180, %153 : vector<2x256xf32>
    %182 = arith.addf %178, %181 : vector<2x256xf32>
    %c31 = arith.constant 31 : index
    %183 = memref.load %arg3[%c31] : memref<72xf32, #tpu.memory_space<smem>>
    %184 = vector.broadcast %183 : f32 to vector<2x256xf32>
    %185 = arith.mulf %184, %154 : vector<2x256xf32>
    %186 = arith.addf %182, %185 : vector<2x256xf32>
    %187 = arith.mulf %186, %14 : vector<2x256xf32>
    %188 = arith.addf %150, %187 : vector<2x256xf32>
    %c32 = arith.constant 32 : index
    %189 = memref.load %arg3[%c32] : memref<72xf32, #tpu.memory_space<smem>>
    %190 = vector.broadcast %189 : f32 to vector<2x256xf32>
    %191 = arith.mulf %190, %28 : vector<2x256xf32>
    %c34 = arith.constant 34 : index
    %192 = memref.load %arg3[%c34] : memref<72xf32, #tpu.memory_space<smem>>
    %193 = vector.broadcast %192 : f32 to vector<2x256xf32>
    %194 = arith.mulf %193, %30 : vector<2x256xf32>
    %195 = arith.addf %191, %194 : vector<2x256xf32>
    %c36 = arith.constant 36 : index
    %196 = memref.load %arg3[%c36] : memref<72xf32, #tpu.memory_space<smem>>
    %197 = vector.broadcast %196 : f32 to vector<2x256xf32>
    %198 = arith.mulf %197, %32 : vector<2x256xf32>
    %199 = arith.addf %195, %198 : vector<2x256xf32>
    %c38 = arith.constant 38 : index
    %200 = memref.load %arg3[%c38] : memref<72xf32, #tpu.memory_space<smem>>
    %201 = vector.broadcast %200 : f32 to vector<2x256xf32>
    %202 = arith.mulf %201, %34 : vector<2x256xf32>
    %203 = arith.addf %199, %202 : vector<2x256xf32>
    %204 = arith.addf %171, %203 : vector<2x256xf32>
    %c33 = arith.constant 33 : index
    %205 = memref.load %arg3[%c33] : memref<72xf32, #tpu.memory_space<smem>>
    %206 = vector.broadcast %205 : f32 to vector<2x256xf32>
    %207 = arith.mulf %206, %28 : vector<2x256xf32>
    %c35 = arith.constant 35 : index
    %208 = memref.load %arg3[%c35] : memref<72xf32, #tpu.memory_space<smem>>
    %209 = vector.broadcast %208 : f32 to vector<2x256xf32>
    %210 = arith.mulf %209, %30 : vector<2x256xf32>
    %211 = arith.addf %207, %210 : vector<2x256xf32>
    %c37 = arith.constant 37 : index
    %212 = memref.load %arg3[%c37] : memref<72xf32, #tpu.memory_space<smem>>
    %213 = vector.broadcast %212 : f32 to vector<2x256xf32>
    %214 = arith.mulf %213, %32 : vector<2x256xf32>
    %215 = arith.addf %211, %214 : vector<2x256xf32>
    %c39 = arith.constant 39 : index
    %216 = memref.load %arg3[%c39] : memref<72xf32, #tpu.memory_space<smem>>
    %217 = vector.broadcast %216 : f32 to vector<2x256xf32>
    %218 = arith.mulf %217, %34 : vector<2x256xf32>
    %219 = arith.addf %215, %218 : vector<2x256xf32>
    %220 = arith.addf %188, %219 : vector<2x256xf32>
    %c255_i32 = arith.constant 255 : i32
    %221 = tpu.dynamic_rotate %28 by %c255_i32 dim 1 : vector<2x256xf32>, i32 -> vector<2x256xf32>
    %c255_i32_19 = arith.constant 255 : i32
    %222 = tpu.dynamic_rotate %30 by %c255_i32_19 dim 1 : vector<2x256xf32>, i32 -> vector<2x256xf32>
    %c255_i32_20 = arith.constant 255 : i32
    %223 = tpu.dynamic_rotate %32 by %c255_i32_20 dim 1 : vector<2x256xf32>, i32 -> vector<2x256xf32>
    %c255_i32_21 = arith.constant 255 : i32
    %224 = tpu.dynamic_rotate %34 by %c255_i32_21 dim 1 : vector<2x256xf32>, i32 -> vector<2x256xf32>
    %c40 = arith.constant 40 : index
    %225 = memref.load %arg3[%c40] : memref<72xf32, #tpu.memory_space<smem>>
    %226 = vector.broadcast %225 : f32 to vector<2x256xf32>
    %227 = arith.mulf %226, %221 : vector<2x256xf32>
    %c42 = arith.constant 42 : index
    %228 = memref.load %arg3[%c42] : memref<72xf32, #tpu.memory_space<smem>>
    %229 = vector.broadcast %228 : f32 to vector<2x256xf32>
    %230 = arith.mulf %229, %222 : vector<2x256xf32>
    %231 = arith.addf %227, %230 : vector<2x256xf32>
    %c44 = arith.constant 44 : index
    %232 = memref.load %arg3[%c44] : memref<72xf32, #tpu.memory_space<smem>>
    %233 = vector.broadcast %232 : f32 to vector<2x256xf32>
    %234 = arith.mulf %233, %223 : vector<2x256xf32>
    %235 = arith.addf %231, %234 : vector<2x256xf32>
    %c46 = arith.constant 46 : index
    %236 = memref.load %arg3[%c46] : memref<72xf32, #tpu.memory_space<smem>>
    %237 = vector.broadcast %236 : f32 to vector<2x256xf32>
    %238 = arith.mulf %237, %224 : vector<2x256xf32>
    %239 = arith.addf %235, %238 : vector<2x256xf32>
    %240 = arith.mulf %239, %17 : vector<2x256xf32>
    %241 = arith.addf %204, %240 : vector<2x256xf32>
    %c41 = arith.constant 41 : index
    %242 = memref.load %arg3[%c41] : memref<72xf32, #tpu.memory_space<smem>>
    %243 = vector.broadcast %242 : f32 to vector<2x256xf32>
    %244 = arith.mulf %243, %221 : vector<2x256xf32>
    %c43 = arith.constant 43 : index
    %245 = memref.load %arg3[%c43] : memref<72xf32, #tpu.memory_space<smem>>
    %246 = vector.broadcast %245 : f32 to vector<2x256xf32>
    %247 = arith.mulf %246, %222 : vector<2x256xf32>
    %248 = arith.addf %244, %247 : vector<2x256xf32>
    %c45 = arith.constant 45 : index
    %249 = memref.load %arg3[%c45] : memref<72xf32, #tpu.memory_space<smem>>
    %250 = vector.broadcast %249 : f32 to vector<2x256xf32>
    %251 = arith.mulf %250, %223 : vector<2x256xf32>
    %252 = arith.addf %248, %251 : vector<2x256xf32>
    %c47 = arith.constant 47 : index
    %253 = memref.load %arg3[%c47] : memref<72xf32, #tpu.memory_space<smem>>
    %254 = vector.broadcast %253 : f32 to vector<2x256xf32>
    %255 = arith.mulf %254, %224 : vector<2x256xf32>
    %256 = arith.addf %252, %255 : vector<2x256xf32>
    %257 = arith.mulf %256, %17 : vector<2x256xf32>
    %258 = arith.addf %220, %257 : vector<2x256xf32>
    %c241_i32 = arith.constant 241 : i32
    %259 = tpu.dynamic_rotate %28 by %c241_i32 dim 1 : vector<2x256xf32>, i32 -> vector<2x256xf32>
    %c241_i32_22 = arith.constant 241 : i32
    %260 = tpu.dynamic_rotate %30 by %c241_i32_22 dim 1 : vector<2x256xf32>, i32 -> vector<2x256xf32>
    %c241_i32_23 = arith.constant 241 : i32
    %261 = tpu.dynamic_rotate %32 by %c241_i32_23 dim 1 : vector<2x256xf32>, i32 -> vector<2x256xf32>
    %c241_i32_24 = arith.constant 241 : i32
    %262 = tpu.dynamic_rotate %34 by %c241_i32_24 dim 1 : vector<2x256xf32>, i32 -> vector<2x256xf32>
    %c48 = arith.constant 48 : index
    %263 = memref.load %arg3[%c48] : memref<72xf32, #tpu.memory_space<smem>>
    %264 = vector.broadcast %263 : f32 to vector<2x256xf32>
    %265 = arith.mulf %264, %259 : vector<2x256xf32>
    %c50 = arith.constant 50 : index
    %266 = memref.load %arg3[%c50] : memref<72xf32, #tpu.memory_space<smem>>
    %267 = vector.broadcast %266 : f32 to vector<2x256xf32>
    %268 = arith.mulf %267, %260 : vector<2x256xf32>
    %269 = arith.addf %265, %268 : vector<2x256xf32>
    %c52 = arith.constant 52 : index
    %270 = memref.load %arg3[%c52] : memref<72xf32, #tpu.memory_space<smem>>
    %271 = vector.broadcast %270 : f32 to vector<2x256xf32>
    %272 = arith.mulf %271, %261 : vector<2x256xf32>
    %273 = arith.addf %269, %272 : vector<2x256xf32>
    %c54 = arith.constant 54 : index
    %274 = memref.load %arg3[%c54] : memref<72xf32, #tpu.memory_space<smem>>
    %275 = vector.broadcast %274 : f32 to vector<2x256xf32>
    %276 = arith.mulf %275, %262 : vector<2x256xf32>
    %277 = arith.addf %273, %276 : vector<2x256xf32>
    %278 = arith.mulf %277, %20 : vector<2x256xf32>
    %279 = arith.addf %241, %278 : vector<2x256xf32>
    %c49 = arith.constant 49 : index
    %280 = memref.load %arg3[%c49] : memref<72xf32, #tpu.memory_space<smem>>
    %281 = vector.broadcast %280 : f32 to vector<2x256xf32>
    %282 = arith.mulf %281, %259 : vector<2x256xf32>
    %c51 = arith.constant 51 : index
    %283 = memref.load %arg3[%c51] : memref<72xf32, #tpu.memory_space<smem>>
    %284 = vector.broadcast %283 : f32 to vector<2x256xf32>
    %285 = arith.mulf %284, %260 : vector<2x256xf32>
    %286 = arith.addf %282, %285 : vector<2x256xf32>
    %c53 = arith.constant 53 : index
    %287 = memref.load %arg3[%c53] : memref<72xf32, #tpu.memory_space<smem>>
    %288 = vector.broadcast %287 : f32 to vector<2x256xf32>
    %289 = arith.mulf %288, %261 : vector<2x256xf32>
    %290 = arith.addf %286, %289 : vector<2x256xf32>
    %c55 = arith.constant 55 : index
    %291 = memref.load %arg3[%c55] : memref<72xf32, #tpu.memory_space<smem>>
    %292 = vector.broadcast %291 : f32 to vector<2x256xf32>
    %293 = arith.mulf %292, %262 : vector<2x256xf32>
    %294 = arith.addf %290, %293 : vector<2x256xf32>
    %295 = arith.mulf %294, %20 : vector<2x256xf32>
    %296 = arith.addf %258, %295 : vector<2x256xf32>
    %c240_i32 = arith.constant 240 : i32
    %297 = tpu.dynamic_rotate %28 by %c240_i32 dim 1 : vector<2x256xf32>, i32 -> vector<2x256xf32>
    %c240_i32_25 = arith.constant 240 : i32
    %298 = tpu.dynamic_rotate %30 by %c240_i32_25 dim 1 : vector<2x256xf32>, i32 -> vector<2x256xf32>
    %c240_i32_26 = arith.constant 240 : i32
    %299 = tpu.dynamic_rotate %32 by %c240_i32_26 dim 1 : vector<2x256xf32>, i32 -> vector<2x256xf32>
    %c240_i32_27 = arith.constant 240 : i32
    %300 = tpu.dynamic_rotate %34 by %c240_i32_27 dim 1 : vector<2x256xf32>, i32 -> vector<2x256xf32>
    %c56 = arith.constant 56 : index
    %301 = memref.load %arg3[%c56] : memref<72xf32, #tpu.memory_space<smem>>
    %302 = vector.broadcast %301 : f32 to vector<2x256xf32>
    %303 = arith.mulf %302, %297 : vector<2x256xf32>
    %c58 = arith.constant 58 : index
    %304 = memref.load %arg3[%c58] : memref<72xf32, #tpu.memory_space<smem>>
    %305 = vector.broadcast %304 : f32 to vector<2x256xf32>
    %306 = arith.mulf %305, %298 : vector<2x256xf32>
    %307 = arith.addf %303, %306 : vector<2x256xf32>
    %c60 = arith.constant 60 : index
    %308 = memref.load %arg3[%c60] : memref<72xf32, #tpu.memory_space<smem>>
    %309 = vector.broadcast %308 : f32 to vector<2x256xf32>
    %310 = arith.mulf %309, %299 : vector<2x256xf32>
    %311 = arith.addf %307, %310 : vector<2x256xf32>
    %c62 = arith.constant 62 : index
    %312 = memref.load %arg3[%c62] : memref<72xf32, #tpu.memory_space<smem>>
    %313 = vector.broadcast %312 : f32 to vector<2x256xf32>
    %314 = arith.mulf %313, %300 : vector<2x256xf32>
    %315 = arith.addf %311, %314 : vector<2x256xf32>
    %316 = arith.mulf %315, %23 : vector<2x256xf32>
    %317 = arith.addf %279, %316 : vector<2x256xf32>
    %c57 = arith.constant 57 : index
    %318 = memref.load %arg3[%c57] : memref<72xf32, #tpu.memory_space<smem>>
    %319 = vector.broadcast %318 : f32 to vector<2x256xf32>
    %320 = arith.mulf %319, %297 : vector<2x256xf32>
    %c59 = arith.constant 59 : index
    %321 = memref.load %arg3[%c59] : memref<72xf32, #tpu.memory_space<smem>>
    %322 = vector.broadcast %321 : f32 to vector<2x256xf32>
    %323 = arith.mulf %322, %298 : vector<2x256xf32>
    %324 = arith.addf %320, %323 : vector<2x256xf32>
    %c61 = arith.constant 61 : index
    %325 = memref.load %arg3[%c61] : memref<72xf32, #tpu.memory_space<smem>>
    %326 = vector.broadcast %325 : f32 to vector<2x256xf32>
    %327 = arith.mulf %326, %299 : vector<2x256xf32>
    %328 = arith.addf %324, %327 : vector<2x256xf32>
    %c63 = arith.constant 63 : index
    %329 = memref.load %arg3[%c63] : memref<72xf32, #tpu.memory_space<smem>>
    %330 = vector.broadcast %329 : f32 to vector<2x256xf32>
    %331 = arith.mulf %330, %300 : vector<2x256xf32>
    %332 = arith.addf %328, %331 : vector<2x256xf32>
    %333 = arith.mulf %332, %23 : vector<2x256xf32>
    %334 = arith.addf %296, %333 : vector<2x256xf32>
    %c239_i32 = arith.constant 239 : i32
    %335 = tpu.dynamic_rotate %28 by %c239_i32 dim 1 : vector<2x256xf32>, i32 -> vector<2x256xf32>
    %c239_i32_28 = arith.constant 239 : i32
    %336 = tpu.dynamic_rotate %30 by %c239_i32_28 dim 1 : vector<2x256xf32>, i32 -> vector<2x256xf32>
    %c239_i32_29 = arith.constant 239 : i32
    %337 = tpu.dynamic_rotate %32 by %c239_i32_29 dim 1 : vector<2x256xf32>, i32 -> vector<2x256xf32>
    %c239_i32_30 = arith.constant 239 : i32
    %338 = tpu.dynamic_rotate %34 by %c239_i32_30 dim 1 : vector<2x256xf32>, i32 -> vector<2x256xf32>
    %c64 = arith.constant 64 : index
    %339 = memref.load %arg3[%c64] : memref<72xf32, #tpu.memory_space<smem>>
    %340 = vector.broadcast %339 : f32 to vector<2x256xf32>
    %341 = arith.mulf %340, %335 : vector<2x256xf32>
    %c66 = arith.constant 66 : index
    %342 = memref.load %arg3[%c66] : memref<72xf32, #tpu.memory_space<smem>>
    %343 = vector.broadcast %342 : f32 to vector<2x256xf32>
    %344 = arith.mulf %343, %336 : vector<2x256xf32>
    %345 = arith.addf %341, %344 : vector<2x256xf32>
    %c68 = arith.constant 68 : index
    %346 = memref.load %arg3[%c68] : memref<72xf32, #tpu.memory_space<smem>>
    %347 = vector.broadcast %346 : f32 to vector<2x256xf32>
    %348 = arith.mulf %347, %337 : vector<2x256xf32>
    %349 = arith.addf %345, %348 : vector<2x256xf32>
    %c70 = arith.constant 70 : index
    %350 = memref.load %arg3[%c70] : memref<72xf32, #tpu.memory_space<smem>>
    %351 = vector.broadcast %350 : f32 to vector<2x256xf32>
    %352 = arith.mulf %351, %338 : vector<2x256xf32>
    %353 = arith.addf %349, %352 : vector<2x256xf32>
    %354 = arith.mulf %353, %26 : vector<2x256xf32>
    %355 = arith.addf %317, %354 : vector<2x256xf32>
    %c65 = arith.constant 65 : index
    %356 = memref.load %arg3[%c65] : memref<72xf32, #tpu.memory_space<smem>>
    %357 = vector.broadcast %356 : f32 to vector<2x256xf32>
    %358 = arith.mulf %357, %335 : vector<2x256xf32>
    %c67 = arith.constant 67 : index
    %359 = memref.load %arg3[%c67] : memref<72xf32, #tpu.memory_space<smem>>
    %360 = vector.broadcast %359 : f32 to vector<2x256xf32>
    %361 = arith.mulf %360, %336 : vector<2x256xf32>
    %362 = arith.addf %358, %361 : vector<2x256xf32>
    %c69 = arith.constant 69 : index
    %363 = memref.load %arg3[%c69] : memref<72xf32, #tpu.memory_space<smem>>
    %364 = vector.broadcast %363 : f32 to vector<2x256xf32>
    %365 = arith.mulf %364, %337 : vector<2x256xf32>
    %366 = arith.addf %362, %365 : vector<2x256xf32>
    %c71 = arith.constant 71 : index
    %367 = memref.load %arg3[%c71] : memref<72xf32, #tpu.memory_space<smem>>
    %368 = vector.broadcast %367 : f32 to vector<2x256xf32>
    %369 = arith.mulf %368, %338 : vector<2x256xf32>
    %370 = arith.addf %366, %369 : vector<2x256xf32>
    %371 = arith.mulf %370, %26 : vector<2x256xf32>
    %372 = arith.addf %334, %371 : vector<2x256xf32>
    %c0_31 = arith.constant 0 : index
    %373 = memref.load %arg4[%c0_31] : memref<2xf32, #tpu.memory_space<smem>>
    %374 = vector.broadcast %373 : f32 to vector<2x256xf32>
    %375 = arith.addf %355, %374 : vector<2x256xf32>
    %cst_32 = arith.constant 0.000000e+00 : f32
    %376 = vector.broadcast %cst_32 : f32 to vector<2x256xf32>
    %377 = arith.maximumf %375, %376 : vector<2x256xf32>
    %c1_33 = arith.constant 1 : index
    %378 = memref.load %arg4[%c1_33] : memref<2xf32, #tpu.memory_space<smem>>
    %379 = vector.broadcast %378 : f32 to vector<2x256xf32>
    %380 = arith.addf %372, %379 : vector<2x256xf32>
    %cst_34 = arith.constant 0.000000e+00 : f32
    %381 = vector.broadcast %cst_34 : f32 to vector<2x256xf32>
    %382 = arith.maximumf %380, %381 : vector<2x256xf32>
    %cst_35 = arith.constant 0.000000e+00 : f32
    %383 = vector.broadcast %cst_35 : f32 to vector<2x256xf32>
    %cst_36 = arith.constant 0.000000e+00 : f32
    %384 = vector.broadcast %cst_36 : f32 to vector<2x256xf32>
    %c17_i32_37 = arith.constant 17 : i32
    %385 = tpu.dynamic_rotate %377 by %c17_i32_37 dim 1 : vector<2x256xf32>, i32 -> vector<2x256xf32>
    %c17_i32_38 = arith.constant 17 : i32
    %386 = tpu.dynamic_rotate %382 by %c17_i32_38 dim 1 : vector<2x256xf32>, i32 -> vector<2x256xf32>
    %c0_39 = arith.constant 0 : index
    %387 = memref.load %arg5[%c0_39] : memref<36xf32, #tpu.memory_space<smem>>
    %388 = vector.broadcast %387 : f32 to vector<2x256xf32>
    %389 = arith.mulf %388, %385 : vector<2x256xf32>
    %c2_40 = arith.constant 2 : index
    %390 = memref.load %arg5[%c2_40] : memref<36xf32, #tpu.memory_space<smem>>
    %391 = vector.broadcast %390 : f32 to vector<2x256xf32>
    %392 = arith.mulf %391, %386 : vector<2x256xf32>
    %393 = arith.addf %389, %392 : vector<2x256xf32>
    %394 = arith.mulf %393, %5 : vector<2x256xf32>
    %395 = arith.addf %383, %394 : vector<2x256xf32>
    %c1_41 = arith.constant 1 : index
    %396 = memref.load %arg5[%c1_41] : memref<36xf32, #tpu.memory_space<smem>>
    %397 = vector.broadcast %396 : f32 to vector<2x256xf32>
    %398 = arith.mulf %397, %385 : vector<2x256xf32>
    %c3_42 = arith.constant 3 : index
    %399 = memref.load %arg5[%c3_42] : memref<36xf32, #tpu.memory_space<smem>>
    %400 = vector.broadcast %399 : f32 to vector<2x256xf32>
    %401 = arith.mulf %400, %386 : vector<2x256xf32>
    %402 = arith.addf %398, %401 : vector<2x256xf32>
    %403 = arith.mulf %402, %5 : vector<2x256xf32>
    %404 = arith.addf %384, %403 : vector<2x256xf32>
    %c16_i32_43 = arith.constant 16 : i32
    %405 = tpu.dynamic_rotate %377 by %c16_i32_43 dim 1 : vector<2x256xf32>, i32 -> vector<2x256xf32>
    %c16_i32_44 = arith.constant 16 : i32
    %406 = tpu.dynamic_rotate %382 by %c16_i32_44 dim 1 : vector<2x256xf32>, i32 -> vector<2x256xf32>
    %c4_45 = arith.constant 4 : index
    %407 = memref.load %arg5[%c4_45] : memref<36xf32, #tpu.memory_space<smem>>
    %408 = vector.broadcast %407 : f32 to vector<2x256xf32>
    %409 = arith.mulf %408, %405 : vector<2x256xf32>
    %c6_46 = arith.constant 6 : index
    %410 = memref.load %arg5[%c6_46] : memref<36xf32, #tpu.memory_space<smem>>
    %411 = vector.broadcast %410 : f32 to vector<2x256xf32>
    %412 = arith.mulf %411, %406 : vector<2x256xf32>
    %413 = arith.addf %409, %412 : vector<2x256xf32>
    %414 = arith.mulf %413, %8 : vector<2x256xf32>
    %415 = arith.addf %395, %414 : vector<2x256xf32>
    %c5_47 = arith.constant 5 : index
    %416 = memref.load %arg5[%c5_47] : memref<36xf32, #tpu.memory_space<smem>>
    %417 = vector.broadcast %416 : f32 to vector<2x256xf32>
    %418 = arith.mulf %417, %405 : vector<2x256xf32>
    %c7_48 = arith.constant 7 : index
    %419 = memref.load %arg5[%c7_48] : memref<36xf32, #tpu.memory_space<smem>>
    %420 = vector.broadcast %419 : f32 to vector<2x256xf32>
    %421 = arith.mulf %420, %406 : vector<2x256xf32>
    %422 = arith.addf %418, %421 : vector<2x256xf32>
    %423 = arith.mulf %422, %8 : vector<2x256xf32>
    %424 = arith.addf %404, %423 : vector<2x256xf32>
    %c15_i32_49 = arith.constant 15 : i32
    %425 = tpu.dynamic_rotate %377 by %c15_i32_49 dim 1 : vector<2x256xf32>, i32 -> vector<2x256xf32>
    %c15_i32_50 = arith.constant 15 : i32
    %426 = tpu.dynamic_rotate %382 by %c15_i32_50 dim 1 : vector<2x256xf32>, i32 -> vector<2x256xf32>
    %c8_51 = arith.constant 8 : index
    %427 = memref.load %arg5[%c8_51] : memref<36xf32, #tpu.memory_space<smem>>
    %428 = vector.broadcast %427 : f32 to vector<2x256xf32>
    %429 = arith.mulf %428, %425 : vector<2x256xf32>
    %c10_52 = arith.constant 10 : index
    %430 = memref.load %arg5[%c10_52] : memref<36xf32, #tpu.memory_space<smem>>
    %431 = vector.broadcast %430 : f32 to vector<2x256xf32>
    %432 = arith.mulf %431, %426 : vector<2x256xf32>
    %433 = arith.addf %429, %432 : vector<2x256xf32>
    %434 = arith.mulf %433, %11 : vector<2x256xf32>
    %435 = arith.addf %415, %434 : vector<2x256xf32>
    %c9_53 = arith.constant 9 : index
    %436 = memref.load %arg5[%c9_53] : memref<36xf32, #tpu.memory_space<smem>>
    %437 = vector.broadcast %436 : f32 to vector<2x256xf32>
    %438 = arith.mulf %437, %425 : vector<2x256xf32>
    %c11_54 = arith.constant 11 : index
    %439 = memref.load %arg5[%c11_54] : memref<36xf32, #tpu.memory_space<smem>>
    %440 = vector.broadcast %439 : f32 to vector<2x256xf32>
    %441 = arith.mulf %440, %426 : vector<2x256xf32>
    %442 = arith.addf %438, %441 : vector<2x256xf32>
    %443 = arith.mulf %442, %11 : vector<2x256xf32>
    %444 = arith.addf %424, %443 : vector<2x256xf32>
    %c1_i32_55 = arith.constant 1 : i32
    %445 = tpu.dynamic_rotate %377 by %c1_i32_55 dim 1 : vector<2x256xf32>, i32 -> vector<2x256xf32>
    %c1_i32_56 = arith.constant 1 : i32
    %446 = tpu.dynamic_rotate %382 by %c1_i32_56 dim 1 : vector<2x256xf32>, i32 -> vector<2x256xf32>
    %c12_57 = arith.constant 12 : index
    %447 = memref.load %arg5[%c12_57] : memref<36xf32, #tpu.memory_space<smem>>
    %448 = vector.broadcast %447 : f32 to vector<2x256xf32>
    %449 = arith.mulf %448, %445 : vector<2x256xf32>
    %c14_58 = arith.constant 14 : index
    %450 = memref.load %arg5[%c14_58] : memref<36xf32, #tpu.memory_space<smem>>
    %451 = vector.broadcast %450 : f32 to vector<2x256xf32>
    %452 = arith.mulf %451, %446 : vector<2x256xf32>
    %453 = arith.addf %449, %452 : vector<2x256xf32>
    %454 = arith.mulf %453, %14 : vector<2x256xf32>
    %455 = arith.addf %435, %454 : vector<2x256xf32>
    %c13_59 = arith.constant 13 : index
    %456 = memref.load %arg5[%c13_59] : memref<36xf32, #tpu.memory_space<smem>>
    %457 = vector.broadcast %456 : f32 to vector<2x256xf32>
    %458 = arith.mulf %457, %445 : vector<2x256xf32>
    %c15_60 = arith.constant 15 : index
    %459 = memref.load %arg5[%c15_60] : memref<36xf32, #tpu.memory_space<smem>>
    %460 = vector.broadcast %459 : f32 to vector<2x256xf32>
    %461 = arith.mulf %460, %446 : vector<2x256xf32>
    %462 = arith.addf %458, %461 : vector<2x256xf32>
    %463 = arith.mulf %462, %14 : vector<2x256xf32>
    %464 = arith.addf %444, %463 : vector<2x256xf32>
    %c16_61 = arith.constant 16 : index
    %465 = memref.load %arg5[%c16_61] : memref<36xf32, #tpu.memory_space<smem>>
    %466 = vector.broadcast %465 : f32 to vector<2x256xf32>
    %467 = arith.mulf %466, %377 : vector<2x256xf32>
    %c18_62 = arith.constant 18 : index
    %468 = memref.load %arg5[%c18_62] : memref<36xf32, #tpu.memory_space<smem>>
    %469 = vector.broadcast %468 : f32 to vector<2x256xf32>
    %470 = arith.mulf %469, %382 : vector<2x256xf32>
    %471 = arith.addf %467, %470 : vector<2x256xf32>
    %472 = arith.addf %455, %471 : vector<2x256xf32>
    %c17_63 = arith.constant 17 : index
    %473 = memref.load %arg5[%c17_63] : memref<36xf32, #tpu.memory_space<smem>>
    %474 = vector.broadcast %473 : f32 to vector<2x256xf32>
    %475 = arith.mulf %474, %377 : vector<2x256xf32>
    %c19_64 = arith.constant 19 : index
    %476 = memref.load %arg5[%c19_64] : memref<36xf32, #tpu.memory_space<smem>>
    %477 = vector.broadcast %476 : f32 to vector<2x256xf32>
    %478 = arith.mulf %477, %382 : vector<2x256xf32>
    %479 = arith.addf %475, %478 : vector<2x256xf32>
    %480 = arith.addf %464, %479 : vector<2x256xf32>
    %c255_i32_65 = arith.constant 255 : i32
    %481 = tpu.dynamic_rotate %377 by %c255_i32_65 dim 1 : vector<2x256xf32>, i32 -> vector<2x256xf32>
    %c255_i32_66 = arith.constant 255 : i32
    %482 = tpu.dynamic_rotate %382 by %c255_i32_66 dim 1 : vector<2x256xf32>, i32 -> vector<2x256xf32>
    %c20_67 = arith.constant 20 : index
    %483 = memref.load %arg5[%c20_67] : memref<36xf32, #tpu.memory_space<smem>>
    %484 = vector.broadcast %483 : f32 to vector<2x256xf32>
    %485 = arith.mulf %484, %481 : vector<2x256xf32>
    %c22_68 = arith.constant 22 : index
    %486 = memref.load %arg5[%c22_68] : memref<36xf32, #tpu.memory_space<smem>>
    %487 = vector.broadcast %486 : f32 to vector<2x256xf32>
    %488 = arith.mulf %487, %482 : vector<2x256xf32>
    %489 = arith.addf %485, %488 : vector<2x256xf32>
    %490 = arith.mulf %489, %17 : vector<2x256xf32>
    %491 = arith.addf %472, %490 : vector<2x256xf32>
    %c21_69 = arith.constant 21 : index
    %492 = memref.load %arg5[%c21_69] : memref<36xf32, #tpu.memory_space<smem>>
    %493 = vector.broadcast %492 : f32 to vector<2x256xf32>
    %494 = arith.mulf %493, %481 : vector<2x256xf32>
    %c23_70 = arith.constant 23 : index
    %495 = memref.load %arg5[%c23_70] : memref<36xf32, #tpu.memory_space<smem>>
    %496 = vector.broadcast %495 : f32 to vector<2x256xf32>
    %497 = arith.mulf %496, %482 : vector<2x256xf32>
    %498 = arith.addf %494, %497 : vector<2x256xf32>
    %499 = arith.mulf %498, %17 : vector<2x256xf32>
    %500 = arith.addf %480, %499 : vector<2x256xf32>
    %c241_i32_71 = arith.constant 241 : i32
    %501 = tpu.dynamic_rotate %377 by %c241_i32_71 dim 1 : vector<2x256xf32>, i32 -> vector<2x256xf32>
    %c241_i32_72 = arith.constant 241 : i32
    %502 = tpu.dynamic_rotate %382 by %c241_i32_72 dim 1 : vector<2x256xf32>, i32 -> vector<2x256xf32>
    %c24_73 = arith.constant 24 : index
    %503 = memref.load %arg5[%c24_73] : memref<36xf32, #tpu.memory_space<smem>>
    %504 = vector.broadcast %503 : f32 to vector<2x256xf32>
    %505 = arith.mulf %504, %501 : vector<2x256xf32>
    %c26_74 = arith.constant 26 : index
    %506 = memref.load %arg5[%c26_74] : memref<36xf32, #tpu.memory_space<smem>>
    %507 = vector.broadcast %506 : f32 to vector<2x256xf32>
    %508 = arith.mulf %507, %502 : vector<2x256xf32>
    %509 = arith.addf %505, %508 : vector<2x256xf32>
    %510 = arith.mulf %509, %20 : vector<2x256xf32>
    %511 = arith.addf %491, %510 : vector<2x256xf32>
    %c25_75 = arith.constant 25 : index
    %512 = memref.load %arg5[%c25_75] : memref<36xf32, #tpu.memory_space<smem>>
    %513 = vector.broadcast %512 : f32 to vector<2x256xf32>
    %514 = arith.mulf %513, %501 : vector<2x256xf32>
    %c27_76 = arith.constant 27 : index
    %515 = memref.load %arg5[%c27_76] : memref<36xf32, #tpu.memory_space<smem>>
    %516 = vector.broadcast %515 : f32 to vector<2x256xf32>
    %517 = arith.mulf %516, %502 : vector<2x256xf32>
    %518 = arith.addf %514, %517 : vector<2x256xf32>
    %519 = arith.mulf %518, %20 : vector<2x256xf32>
    %520 = arith.addf %500, %519 : vector<2x256xf32>
    %c240_i32_77 = arith.constant 240 : i32
    %521 = tpu.dynamic_rotate %377 by %c240_i32_77 dim 1 : vector<2x256xf32>, i32 -> vector<2x256xf32>
    %c240_i32_78 = arith.constant 240 : i32
    %522 = tpu.dynamic_rotate %382 by %c240_i32_78 dim 1 : vector<2x256xf32>, i32 -> vector<2x256xf32>
    %c28_79 = arith.constant 28 : index
    %523 = memref.load %arg5[%c28_79] : memref<36xf32, #tpu.memory_space<smem>>
    %524 = vector.broadcast %523 : f32 to vector<2x256xf32>
    %525 = arith.mulf %524, %521 : vector<2x256xf32>
    %c30_80 = arith.constant 30 : index
    %526 = memref.load %arg5[%c30_80] : memref<36xf32, #tpu.memory_space<smem>>
    %527 = vector.broadcast %526 : f32 to vector<2x256xf32>
    %528 = arith.mulf %527, %522 : vector<2x256xf32>
    %529 = arith.addf %525, %528 : vector<2x256xf32>
    %530 = arith.mulf %529, %23 : vector<2x256xf32>
    %531 = arith.addf %511, %530 : vector<2x256xf32>
    %c29_81 = arith.constant 29 : index
    %532 = memref.load %arg5[%c29_81] : memref<36xf32, #tpu.memory_space<smem>>
    %533 = vector.broadcast %532 : f32 to vector<2x256xf32>
    %534 = arith.mulf %533, %521 : vector<2x256xf32>
    %c31_82 = arith.constant 31 : index
    %535 = memref.load %arg5[%c31_82] : memref<36xf32, #tpu.memory_space<smem>>
    %536 = vector.broadcast %535 : f32 to vector<2x256xf32>
    %537 = arith.mulf %536, %522 : vector<2x256xf32>
    %538 = arith.addf %534, %537 : vector<2x256xf32>
    %539 = arith.mulf %538, %23 : vector<2x256xf32>
    %540 = arith.addf %520, %539 : vector<2x256xf32>
    %c239_i32_83 = arith.constant 239 : i32
    %541 = tpu.dynamic_rotate %377 by %c239_i32_83 dim 1 : vector<2x256xf32>, i32 -> vector<2x256xf32>
    %c239_i32_84 = arith.constant 239 : i32
    %542 = tpu.dynamic_rotate %382 by %c239_i32_84 dim 1 : vector<2x256xf32>, i32 -> vector<2x256xf32>
    %c32_85 = arith.constant 32 : index
    %543 = memref.load %arg5[%c32_85] : memref<36xf32, #tpu.memory_space<smem>>
    %544 = vector.broadcast %543 : f32 to vector<2x256xf32>
    %545 = arith.mulf %544, %541 : vector<2x256xf32>
    %c34_86 = arith.constant 34 : index
    %546 = memref.load %arg5[%c34_86] : memref<36xf32, #tpu.memory_space<smem>>
    %547 = vector.broadcast %546 : f32 to vector<2x256xf32>
    %548 = arith.mulf %547, %542 : vector<2x256xf32>
    %549 = arith.addf %545, %548 : vector<2x256xf32>
    %550 = arith.mulf %549, %26 : vector<2x256xf32>
    %551 = arith.addf %531, %550 : vector<2x256xf32>
    %c33_87 = arith.constant 33 : index
    %552 = memref.load %arg5[%c33_87] : memref<36xf32, #tpu.memory_space<smem>>
    %553 = vector.broadcast %552 : f32 to vector<2x256xf32>
    %554 = arith.mulf %553, %541 : vector<2x256xf32>
    %c35_88 = arith.constant 35 : index
    %555 = memref.load %arg5[%c35_88] : memref<36xf32, #tpu.memory_space<smem>>
    %556 = vector.broadcast %555 : f32 to vector<2x256xf32>
    %557 = arith.mulf %556, %542 : vector<2x256xf32>
    %558 = arith.addf %554, %557 : vector<2x256xf32>
    %559 = arith.mulf %558, %26 : vector<2x256xf32>
    %560 = arith.addf %540, %559 : vector<2x256xf32>
    %c0_89 = arith.constant 0 : index
    %561 = memref.load %arg6[%c0_89] : memref<2xf32, #tpu.memory_space<smem>>
    %562 = vector.broadcast %561 : f32 to vector<2x256xf32>
    %563 = arith.addf %551, %562 : vector<2x256xf32>
    %cst_90 = arith.constant 0.000000e+00 : f32
    %564 = vector.broadcast %cst_90 : f32 to vector<2x256xf32>
    %565 = arith.maximumf %563, %564 : vector<2x256xf32>
    %c1_91 = arith.constant 1 : index
    %566 = memref.load %arg6[%c1_91] : memref<2xf32, #tpu.memory_space<smem>>
    %567 = vector.broadcast %566 : f32 to vector<2x256xf32>
    %568 = arith.addf %560, %567 : vector<2x256xf32>
    %cst_92 = arith.constant 0.000000e+00 : f32
    %569 = vector.broadcast %cst_92 : f32 to vector<2x256xf32>
    %570 = arith.maximumf %568, %569 : vector<2x256xf32>
    %c0_93 = arith.constant 0 : index
    %571 = memref.load %arg7[%c0_93] : memref<2xf32, #tpu.memory_space<smem>>
    %572 = vector.broadcast %571 : f32 to vector<2x256xf32>
    %573 = arith.mulf %572, %565 : vector<2x256xf32>
    %c1_94 = arith.constant 1 : index
    %574 = memref.load %arg7[%c1_94] : memref<2xf32, #tpu.memory_space<smem>>
    %575 = vector.broadcast %574 : f32 to vector<2x256xf32>
    %576 = arith.mulf %575, %570 : vector<2x256xf32>
    %577 = arith.addf %573, %576 : vector<2x256xf32>
    %c0_95 = arith.constant 0 : index
    %578 = memref.load %arg8[%c0_95] : memref<1xf32, #tpu.memory_space<smem>>
    %579 = vector.broadcast %578 : f32 to vector<2x256xf32>
    %580 = arith.addf %577, %579 : vector<2x256xf32>
    %581 = arith.negf %580 : vector<2x256xf32>
    %582 = math.exp %581 : vector<2x256xf32>
    %cst_96 = arith.constant 1.000000e+00 : f32
    %583 = vector.broadcast %cst_96 : f32 to vector<2x256xf32>
    %584 = arith.addf %583, %582 : vector<2x256xf32>
    %585 = arith.divf %583, %584 : vector<2x256xf32>
    %c0_97 = arith.constant 0 : index
    %c0_98 = arith.constant 0 : index
    %c0_99 = arith.constant 0 : index
    %586 = vector.load %arg9[%c0_97, %c0_98, %c0_99] : memref<1x2x256xf32, #tpu.memory_space<vmem>>, vector<1x2x256xf32>
    %587 = vector.shape_cast %586 : vector<1x2x256xf32> to vector<2x256xf32>
    %588 = vector.shape_cast %585 : vector<2x256xf32> to vector<1x2x256xf32>
    tpu.vector_store %arg9[%c0_97, %c0_98, %c0_99], %588 {strides = array<i32>} : memref<1x2x256xf32, #tpu.memory_space<vmem>>, vector<1x2x256xf32>,
    return
  }
  func.func @transform_0(%arg0: i32) -> (i32, i32) {
    %c0_i32 = arith.constant 0 : i32
    %c0_i32_0 = arith.constant 0 : i32
    %c0_i32_1 = arith.constant 0 : i32
    return %c0_i32, %c0_i32_0 : i32, i32
  }
  func.func @transform_1(%arg0: i32) -> (i32, i32, i32, i32) {
    %c0_i32 = arith.constant 0 : i32
    %c0_i32_0 = arith.constant 0 : i32
    %c0_i32_1 = arith.constant 0 : i32
    %c0_i32_2 = arith.constant 0 : i32
    return %arg0, %c0_i32, %c0_i32_0, %c0_i32_1 : i32, i32, i32, i32
  }
  func.func @transform_2(%arg0: i32) -> i32 {
    %c0_i32 = arith.constant 0 : i32
    %c0_i32_0 = arith.constant 0 : i32
    return %c0_i32 : i32
  }
  func.func @transform_3(%arg0: i32) -> i32 {
    %c0_i32 = arith.constant 0 : i32
    %c0_i32_0 = arith.constant 0 : i32
    return %c0_i32 : i32
  }
  func.func @transform_4(%arg0: i32) -> i32 {
    %c0_i32 = arith.constant 0 : i32
    %c0_i32_0 = arith.constant 0 : i32
    return %c0_i32 : i32
  }
  func.func @transform_5(%arg0: i32) -> i32 {
    %c0_i32 = arith.constant 0 : i32
    %c0_i32_0 = arith.constant 0 : i32
    return %c0_i32 : i32
  }
  func.func @transform_6(%arg0: i32) -> i32 {
    %c0_i32 = arith.constant 0 : i32
    %c0_i32_0 = arith.constant 0 : i32
    return %c0_i32 : i32
  }
  func.func @transform_7(%arg0: i32) -> i32 {
    %c0_i32 = arith.constant 0 : i32
    %c0_i32_0 = arith.constant 0 : i32
    return %c0_i32 : i32
  }
  func.func @transform_8(%arg0: i32) -> (i32, i32, i32) {
    %c0_i32 = arith.constant 0 : i32
    %c0_i32_0 = arith.constant 0 : i32
    %c0_i32_1 = arith.constant 0 : i32
    return %arg0, %c0_i32, %c0_i32_0 : i32, i32, i32
  }
}

</mosaic_0001>

<llo_original>
// kernel: tpu_custom_call.1
$region0: #{tpu_custom_call.1}
  #allocation0 [shape = 'u32[]', space=smem, size = 0x4, offset = 0x4, fixed_abs, tag = 'smem constant byte address 0x4 - core index']
  #allocation1 [shape = 'u32[72,128]{1,0:T(1,128)}', space=vmem, size = 0x9000, scoped, tag = 'internal scratch']
  #allocation2 [shape = 'f32[1]{0:T(128)S(6)}', space=smem, size = 0x200, scoped, tag = 'scoped memory for tpu_custom_call.1']
  %s0 = inlined_call_operand.hbm [shape: f32[8,256], index: 0, kind: input, shape index: {}]
  %s1 = inlined_call_operand.hbm [shape: f32[1,4,2,256], index: 1, kind: input, shape index: {}]
  %s2 = inlined_call_operand.vmem [shape: f32[72], index: 2, kind: input, shape index: {}]
  %s3 = inlined_call_operand.vmem [shape: f32[2], index: 3, kind: input, shape index: {}]
  %s4 = inlined_call_operand.vmem [shape: f32[36], index: 4, kind: input, shape index: {}]
  %s5 = inlined_call_operand.vmem [shape: f32[2], index: 5, kind: input, shape index: {}]
  %s6 = inlined_call_operand.vmem [shape: f32[2], index: 6, kind: input, shape index: {}]
  %s7 = inlined_call_operand.<no memory space> [shape: f32[1], index: 7, kind: input, shape index: {}]
  %s8 = inlined_call_operand.hbm [shape: f32[1,2,256], index: 8, kind: output, shape index: {}]
  %s9 = sld [smem:[#allocation0]]
  $region70: #{tpu_custom_call.1} parent=0
    _
  %s11 = ssub.s32 1, %s9
  %s12 = scalar_select 0, %s11, %s9
  %13 = sst [smem:[#allocation2]] %s7
  $region1: #{tpu_custom_call.1} parent=0
    #allocation3 [shape = 'u8[8192]{0}', space=vmem, size = 0x2000, scoped, tag = 'input window, operand 0, single buffered']
    #allocation4 [shape = 's32[1]{0}', space=sflag, size = 0x4, scoped, tag = 'scoped memory for tpu_custom_call.1']
    #allocation5 [shape = 's32[1]{0}', space=sflag, size = 0x4, scoped, tag = 'scoped memory for tpu_custom_call.1']
    #allocation6 [shape = 's32[1]{0}', space=sflag, size = 0x4, scoped, tag = 'scoped memory for tpu_custom_call.1']
    #allocation7 [shape = 'u8[8192]{0}', space=vmem, size = 0x2000, scoped, tag = 'input window, operand 1, single buffered']
    #allocation8 [shape = 's32[1]{0}', space=sflag, size = 0x4, scoped, tag = 'scoped memory for tpu_custom_call.1']
    #allocation9 [shape = 'u8[512]{0}', space=smem, size = 0x200, scoped, tag = 'input window, operand 2, single buffered']
    #allocation10 [shape = 'u8[512]{0}', space=smem, size = 0x200, scoped, tag = 'input window, operand 3, single buffered']
    #allocation11 [shape = 's32[1]{0}', space=sflag, size = 0x4, scoped, tag = 'scoped memory for tpu_custom_call.1']
    #allocation12 [shape = 'u8[512]{0}', space=smem, size = 0x200, scoped, tag = 'input window, operand 4, single buffered']
    #allocation13 [shape = 'u8[512]{0}', space=smem, size = 0x200, scoped, tag = 'input window, operand 5, single buffered']
    #allocation14 [shape = 's32[1]{0}', space=sflag, size = 0x4, scoped, tag = 'scoped memory for tpu_custom_call.1']
    #allocation15 [shape = 'u8[512]{0}', space=smem, size = 0x200, scoped, tag = 'input window, operand 6, single buffered']
    #allocation16 [shape = 'u8[2048]{0}', space=vmem, size = 0x800, scoped, tag = 'output window, operand 0, single buffered']
    %14 = vsyncpa [#allocation4], 0
    %15 = vsyncpa [#allocation8], 0
    %16 = vsyncpa [#allocation6], 0
    %17 = vsyncpa [#allocation11], 0
    %18 = vsyncpa [#allocation14], 0
    %19 = vsyncpa [#allocation5], 0
    // Predicated region
    $region2: #{tpu_custom_call.1} parent=1 // pred_check
      _
    $region3: #{tpu_custom_call.1} parent=1 // pred_check_branch
      %21 = sbr.rel (0) target = $region5
    $region4: #{tpu_custom_call.1} parent=1 // pred_region
      %23 = vsyncadd [#allocation4], 0
      %s25 = sshll.u32 %s0, 4
      %s26 = int_to_ptr.hbm [resolvable:$true] %s25
      %s27 = sshll.u32 [#allocation3], 4
      %s28 = int_to_ptr.vmem [resolvable:$true] %s27
      %30 = dma.hbm_to_vmem [thread:$0]  %s26, 256, %s28, [#allocation4]
    $region5: #{tpu_custom_call.1} parent=1 // pred_fallthru
      _
    // Predicated region
    $region6: #{tpu_custom_call.1} parent=1 // pred_check
      _
    $region7: #{tpu_custom_call.1} parent=1 // pred_check_branch
      %32 = sbr.rel (0) target = $region9
    $region8: #{tpu_custom_call.1} parent=1 // pred_region
      %34 = vsyncadd [#allocation8], 0
      %s35 = sshll.u32 %s1, 4
      %s36 = int_to_ptr.hbm [resolvable:$true] %s35
      %s37 = sshll.u32 [#allocation7], 4
      %s38 = int_to_ptr.vmem [resolvable:$true] %s37
      %43 = dma.hbm_to_vmem [thread:$0]  %s36, 256, %s38, [#allocation8], 64, 64, 4
    $region9: #{tpu_custom_call.1} parent=1 // pred_fallthru
      _
    // Predicated region
    $region10: #{tpu_custom_call.1} parent=1 // pred_check
      _
    $region11: #{tpu_custom_call.1} parent=1 // pred_check_branch
      %45 = sbr.rel (0) target = $region13
    $region12: #{tpu_custom_call.1} parent=1 // pred_region
      %47 = vsyncadd [#allocation6], 0
      %s49 = sshll.u32 %s2, 4
      %s50 = int_to_ptr.vmem [resolvable:$true] %s49
      %52 = dma.vmem_to_smem %s50, 16, [#allocation9], [#allocation6]
    $region13: #{tpu_custom_call.1} parent=1 // pred_fallthru
      _
    // Predicated region
    $region14: #{tpu_custom_call.1} parent=1 // pred_check
      _
    $region15: #{tpu_custom_call.1} parent=1 // pred_check_branch
      %54 = sbr.rel (0) target = $region17
    $region16: #{tpu_custom_call.1} parent=1 // pred_region
      %56 = vsyncadd [#allocation11], 0
      %s58 = sshll.u32 %s3, 4
      %s59 = int_to_ptr.vmem [resolvable:$true] %s58
      %61 = dma.vmem_to_smem %s59, 16, [#allocation10], [#allocation11]
    $region17: #{tpu_custom_call.1} parent=1 // pred_fallthru
      _
    // Predicated region
    $region18: #{tpu_custom_call.1} parent=1 // pred_check
      _
    $region19: #{tpu_custom_call.1} parent=1 // pred_check_branch
      %63 = sbr.rel (0) target = $region21
    $region20: #{tpu_custom_call.1} parent=1 // pred_region
      %65 = vsyncadd [#allocation11], 0
      %s67 = sshll.u32 %s4, 4
      %s68 = int_to_ptr.vmem [resolvable:$true] %s67
      %70 = dma.vmem_to_smem %s68, 16, [#allocation12], [#allocation11]
    $region21: #{tpu_custom_call.1} parent=1 // pred_fallthru
      _
    // Predicated region
    $region22: #{tpu_custom_call.1} parent=1 // pred_check
      _
    $region23: #{tpu_custom_call.1} parent=1 // pred_check_branch
      %72 = sbr.rel (0) target = $region25
    $region24: #{tpu_custom_call.1} parent=1 // pred_region
      %74 = vsyncadd [#allocation14], 0
      %s76 = sshll.u32 %s5, 4
      %s77 = int_to_ptr.vmem [resolvable:$true] %s76
      %79 = dma.vmem_to_smem %s77, 16, [#allocation13], [#allocation14]
    $region25: #{tpu_custom_call.1} parent=1 // pred_fallthru
      _
    // Predicated region
    $region26: #{tpu_custom_call.1} parent=1 // pred_check
      _
    $region27: #{tpu_custom_call.1} parent=1 // pred_check_branch
      %81 = sbr.rel (0) target = $region29
    $region28: #{tpu_custom_call.1} parent=1 // pred_region
      %83 = vsyncadd [#allocation14], 0
      %s85 = sshll.u32 %s6, 4
      %s86 = int_to_ptr.vmem [resolvable:$true] %s85
      %88 = dma.vmem_to_smem %s86, 16, [#allocation15], [#allocation14]
    $region29: #{tpu_custom_call.1} parent=1 // pred_fallthru
      _
    // Predicated region
    $region30: #{tpu_custom_call.1} parent=1 // pred_check
      _
    $region31: #{tpu_custom_call.1} parent=1 // pred_check_branch
      %90 = sbr.rel (0) target = $region33
    $region32: #{tpu_custom_call.1} parent=1 // pred_region
      _
    $region33: #{tpu_custom_call.1} parent=1 // pred_fallthru
      _
    // Predicated region
    $region34: #{tpu_custom_call.1} parent=1 // pred_check
      _
    $region35: #{tpu_custom_call.1} parent=1 // pred_check_branch
      %92 = sbr.rel (0) target = $region37
    $region36: #{tpu_custom_call.1} parent=1 // pred_region
      %94 = dma.done [#allocation4], 256
    $region37: #{tpu_custom_call.1} parent=1 // pred_fallthru
      _
    // Predicated region
    $region38: #{tpu_custom_call.1} parent=1 // pred_check
      _
    $region39: #{tpu_custom_call.1} parent=1 // pred_check_branch
      %96 = sbr.rel (0) target = $region41
    $region40: #{tpu_custom_call.1} parent=1 // pred_region
      %98 = dma.done [#allocation8], 256
    $region41: #{tpu_custom_call.1} parent=1 // pred_fallthru
      _
    // Predicated region
    $region42: #{tpu_custom_call.1} parent=1 // pred_check
      _
    $region43: #{tpu_custom_call.1} parent=1 // pred_check_branch
      %100 = sbr.rel (0) target = $region45
    $region44: #{tpu_custom_call.1} parent=1 // pred_region
      %102 = dma.done [#allocation6], 16
    $region45: #{tpu_custom_call.1} parent=1 // pred_fallthru
      _
    // Predicated region
    $region46: #{tpu_custom_call.1} parent=1 // pred_check
      _
    $region47: #{tpu_custom_call.1} parent=1 // pred_check_branch
      %104 = sbr.rel (0) target = $region49
    $region48: #{tpu_custom_call.1} parent=1 // pred_region
      %106 = dma.done [#allocation11], 16
    $region49: #{tpu_custom_call.1} parent=1 // pred_fallthru
      _
    // Predicated region
    $region50: #{tpu_custom_call.1} parent=1 // pred_check
      _
    $region51: #{tpu_custom_call.1} parent=1 // pred_check_branch
      %108 = sbr.rel (0) target = $region53
    $region52: #{tpu_custom_call.1} parent=1 // pred_region
      %110 = dma.done [#allocation11], 16
    $region53: #{tpu_custom_call.1} parent=1 // pred_fallthru
      _
    // Predicated region
    $region54: #{tpu_custom_call.1} parent=1 // pred_check
      _
    $region55: #{tpu_custom_call.1} parent=1 // pred_check_branch
      %112 = sbr.rel (0) target = $region57
    $region56: #{tpu_custom_call.1} parent=1 // pred_region
      %114 = dma.done [#allocation14], 16
    $region57: #{tpu_custom_call.1} parent=1 // pred_fallthru
      _
    // Predicated region
    $region58: #{tpu_custom_call.1} parent=1 // pred_check
      _
    $region59: #{tpu_custom_call.1} parent=1 // pred_check_branch
      %116 = sbr.rel (0) target = $region61
    $region60: #{tpu_custom_call.1} parent=1 // pred_region
      %118 = dma.done [#allocation14], 16
    $region61: #{tpu_custom_call.1} parent=1 // pred_fallthru
      _
    %119 = sfence
    %v120 = vld [vmem:[#allocation7] sm:$0xf]
    %v121 = vld [vmem:[#allocation7 + $0x4] sm:$0xf]
    %v122 = vld [vmem:[#allocation7 + $0x8] sm:$0xf]
    %v123 = vld [vmem:[#allocation7 + $0xc] sm:$0xf]
    %v124 = vld [vmem:[#allocation3] sm:$0xff]
    %v125 = vld [vmem:[#allocation3 + $0x8] sm:$0xff]
    %v126 = vperm.slane %v124, 0
    %v127 = vperm.slane %v125, 0
    %v128 = vperm.slane %v124, 1
    %v129 = vperm.slane %v125, 1
    %v130 = vperm.slane %v124, 2
    %v131 = vperm.slane %v125, 2
    %v132 = vperm.slane %v124, 3
    %v133 = vperm.slane %v125, 3
    %v134 = vperm.slane %v124, 4
    %v135 = vperm.slane %v125, 4
    %v136 = vperm.slane %v124, 5
    %v137 = vperm.slane %v125, 5
    %v138 = vperm.slane %v124, 6
    %v139 = vperm.slane %v125, 6
    %v140 = vperm.slane %v124, 7
    %v141 = vperm.slane %v125, 7
    %143 = vst [vmem:[#allocation1] ss:$4 sm:$0xff] %v120
    %v144 = vld.sshfl [vmem:[#allocation1] sm:$0xff pattern:$0x73625140]
    %v145 = vld.sshfl [vmem:[#allocation1 + $0x8] sm:$0xff pattern:$0x73625140]
    %148 = vrot.lane.b32.xlu0 %v144, 17
    %v149 = vpop.permute.xlu0 %148
    %150 = vrot.lane.b32.xlu0 %v145, 17
    %v151 = vpop.permute.xlu0 %150
    %v152 = vlaneseq
    %v153 = vand.u32 %v152, 127
    %vm154 = vcmp.lt.s32.totalorder %v153, 17
    %v155 = vsel %vm154, %v149, %v151
    %v156 = vsel %vm154, %v151, %v149
    %158 = vst [vmem:[#allocation1] ss:$4 sm:$0xff] %v121
    %v159 = vld.sshfl [vmem:[#allocation1] sm:$0xff pattern:$0x73625140]
    %v160 = vld.sshfl [vmem:[#allocation1 + $0x8] sm:$0xff pattern:$0x73625140]
    %163 = vrot.lane.b32.xlu0 %v159, 17
    %v164 = vpop.permute.xlu0 %163
    %165 = vrot.lane.b32.xlu0 %v160, 17
    %v166 = vpop.permute.xlu0 %165
    %v167 = vsel %vm154, %v164, %v166
    %v168 = vsel %vm154, %v166, %v164
    %170 = vst [vmem:[#allocation1] ss:$4 sm:$0xff] %v122
    %v171 = vld.sshfl [vmem:[#allocation1] sm:$0xff pattern:$0x73625140]
    %v172 = vld.sshfl [vmem:[#allocation1 + $0x8] sm:$0xff pattern:$0x73625140]
    %175 = vrot.lane.b32.xlu0 %v171, 17
    %v176 = vpop.permute.xlu0 %175
    %177 = vrot.lane.b32.xlu0 %v172, 17
    %v178 = vpop.permute.xlu0 %177
    %v179 = vsel %vm154, %v176, %v178
    %v180 = vsel %vm154, %v178, %v176
    %182 = vst [vmem:[#allocation1] ss:$4 sm:$0xff] %v123
    %v183 = vld.sshfl [vmem:[#allocation1] sm:$0xff pattern:$0x73625140]
    %v184 = vld.sshfl [vmem:[#allocation1 + $0x8] sm:$0xff pattern:$0x73625140]
    %187 = vrot.lane.b32.xlu0 %v183, 17
    %v188 = vpop.permute.xlu0 %187
    %189 = vrot.lane.b32.xlu0 %v184, 17
    %v190 = vpop.permute.xlu0 %189
    %v191 = vsel %vm154, %v188, %v190
    %v192 = vsel %vm154, %v190, %v188
    %s193 = sld [smem:[#allocation9]]
    %v194 = vstv %s193
    %v195 = vmul.f32 %v194, %v156
    %v196 = vmul.f32 %v194, %v155
    %s197 = sld [smem:[#allocation9 + $0x2]]
    %v198 = vstv %s197
    %v199 = vmul.f32 %v198, %v168
    %v200 = vmul.f32 %v198, %v167
    %v201 = vadd.f32 %v195, %v199
    %v202 = vadd.f32 %v196, %v200
    %s203 = sld [smem:[#allocation9 + $0x4]]
    %v204 = vstv %s203
    %v205 = vmul.f32 %v204, %v180
    %v206 = vmul.f32 %v204, %v179
    %v207 = vadd.f32 %v201, %v205
    %v208 = vadd.f32 %v202, %v206
    %s209 = sld [smem:[#allocation9 + $0x6]]
    %v210 = vstv %s209
    %v211 = vmul.f32 %v210, %v192
    %v212 = vmul.f32 %v210, %v191
    %v213 = vadd.f32 %v207, %v211
    %v214 = vadd.f32 %v208, %v212
    %v215 = vmul.f32 %v213, %v126
    %v216 = vmul.f32 %v214, %v127
    %v217 = vadd.f32 %v215, 0.0
    %v218 = vadd.f32 %v216, 0.0
    %s219 = sld [smem:[#allocation9 + $0x1]]
    %v220 = vstv %s219
    %v221 = vmul.f32 %v220, %v156
    %v222 = vmul.f32 %v220, %v155
    %s223 = sld [smem:[#allocation9 + $0x3]]
    %v224 = vstv %s223
    %v225 = vmul.f32 %v224, %v168
    %v226 = vmul.f32 %v224, %v167
    %v227 = vadd.f32 %v221, %v225
    %v228 = vadd.f32 %v222, %v226
    %s229 = sld [smem:[#allocation9 + $0x5]]
    %v230 = vstv %s229
    %v231 = vmul.f32 %v230, %v180
    %v232 = vmul.f32 %v230, %v179
    %v233 = vadd.f32 %v227, %v231
    %v234 = vadd.f32 %v228, %v232
    %s235 = sld [smem:[#allocation9 + $0x7]]
    %v236 = vstv %s235
    %v237 = vmul.f32 %v236, %v192
    %v238 = vmul.f32 %v236, %v191
    %v239 = vadd.f32 %v233, %v237
    %v240 = vadd.f32 %v234, %v238
    %v241 = vmul.f32 %v239, %v126
    %v242 = vmul.f32 %v240, %v127
    %v243 = vadd.f32 %v241, 0.0
    %v244 = vadd.f32 %v242, 0.0
    %245 = vst [vmem:[#allocation1] ss:$4 sm:$0xff] %v120
    %v246 = vld.sshfl [vmem:[#allocation1] sm:$0xff pattern:$0x73625140]
    %v247 = vld.sshfl [vmem:[#allocation1 + $0x8] sm:$0xff pattern:$0x73625140]
    %250 = vrot.lane.b32.xlu0 %v246, 16
    %v251 = vpop.permute.xlu0 %250
    %252 = vrot.lane.b32.xlu0 %v247, 16
    %v253 = vpop.permute.xlu0 %252
    %vm254 = vcmp.lt.s32.totalorder %v153, 16
    %v255 = vsel %vm254, %v251, %v253
    %v256 = vsel %vm254, %v253, %v251
    %257 = vst [vmem:[#allocation1] ss:$4 sm:$0xff] %v121
    %v258 = vld.sshfl [vmem:[#allocation1] sm:$0xff pattern:$0x73625140]
    %v259 = vld.sshfl [vmem:[#allocation1 + $0x8] sm:$0xff pattern:$0x73625140]
    %262 = vrot.lane.b32.xlu0 %v258, 16
    %v263 = vpop.permute.xlu0 %262
    %264 = vrot.lane.b32.xlu0 %v259, 16
    %v265 = vpop.permute.xlu0 %264
    %v266 = vsel %vm254, %v263, %v265
    %v267 = vsel %vm254, %v265, %v263
    %268 = vst [vmem:[#allocation1] ss:$4 sm:$0xff] %v122
    %v269 = vld.sshfl [vmem:[#allocation1] sm:$0xff pattern:$0x73625140]
    %v270 = vld.sshfl [vmem:[#allocation1 + $0x8] sm:$0xff pattern:$0x73625140]
    %273 = vrot.lane.b32.xlu0 %v269, 16
    %v274 = vpop.permute.xlu0 %273
    %275 = vrot.lane.b32.xlu0 %v270, 16
    %v276 = vpop.permute.xlu0 %275
    %v277 = vsel %vm254, %v274, %v276
    %v278 = vsel %vm254, %v276, %v274
    %279 = vst [vmem:[#allocation1] ss:$4 sm:$0xff] %v123
    %v280 = vld.sshfl [vmem:[#allocation1] sm:$0xff pattern:$0x73625140]
    %v281 = vld.sshfl [vmem:[#allocation1 + $0x8] sm:$0xff pattern:$0x73625140]
    %284 = vrot.lane.b32.xlu0 %v280, 16
    %v285 = vpop.permute.xlu0 %284
    %286 = vrot.lane.b32.xlu0 %v281, 16
    %v287 = vpop.permute.xlu0 %286
    %v288 = vsel %vm254, %v285, %v287
    %v289 = vsel %vm254, %v287, %v285
    %s290 = sld [smem:[#allocation9 + $0x8]]
    %v291 = vstv %s290
    %v292 = vmul.f32 %v291, %v256
    %v293 = vmul.f32 %v291, %v255
    %s294 = sld [smem:[#allocation9 + $0xa]]
    %v295 = vstv %s294
    %v296 = vmul.f32 %v295, %v267
    %v297 = vmul.f32 %v295, %v266
    %v298 = vadd.f32 %v292, %v296
    %v299 = vadd.f32 %v293, %v297
    %s300 = sld [smem:[#allocation9 + $0xc]]
    %v301 = vstv %s300
    %v302 = vmul.f32 %v301, %v278
    %v303 = vmul.f32 %v301, %v277
    %v304 = vadd.f32 %v298, %v302
    %v305 = vadd.f32 %v299, %v303
    %s306 = sld [smem:[#allocation9 + $0xe]]
    %v307 = vstv %s306
    %v308 = vmul.f32 %v307, %v289
    %v309 = vmul.f32 %v307, %v288
    %v310 = vadd.f32 %v304, %v308
    %v311 = vadd.f32 %v305, %v309
    %v312 = vmul.f32 %v310, %v128
    %v313 = vmul.f32 %v311, %v129
    %v314 = vadd.f32 %v217, %v312
    %v315 = vadd.f32 %v218, %v313
    %s316 = sld [smem:[#allocation9 + $0x9]]
    %v317 = vstv %s316
    %v318 = vmul.f32 %v317, %v256
    %v319 = vmul.f32 %v317, %v255
    %s320 = sld [smem:[#allocation9 + $0xb]]
    %v321 = vstv %s320
    %v322 = vmul.f32 %v321, %v267
    %v323 = vmul.f32 %v321, %v266
    %v324 = vadd.f32 %v318, %v322
    %v325 = vadd.f32 %v319, %v323
    %s326 = sld [smem:[#allocation9 + $0xd]]
    %v327 = vstv %s326
    %v328 = vmul.f32 %v327, %v278
    %v329 = vmul.f32 %v327, %v277
    %v330 = vadd.f32 %v324, %v328
    %v331 = vadd.f32 %v325, %v329
    %s332 = sld [smem:[#allocation9 + $0xf]]
    %v333 = vstv %s332
    %v334 = vmul.f32 %v333, %v289
    %v335 = vmul.f32 %v333, %v288
    %v336 = vadd.f32 %v330, %v334
    %v337 = vadd.f32 %v331, %v335
    %v338 = vmul.f32 %v336, %v128
    %v339 = vmul.f32 %v337, %v129
    %v340 = vadd.f32 %v243, %v338
    %v341 = vadd.f32 %v244, %v339
    %342 = vst [vmem:[#allocation1] ss:$4 sm:$0xff] %v120
    %v343 = vld.sshfl [vmem:[#allocation1] sm:$0xff pattern:$0x73625140]
    %v344 = vld.sshfl [vmem:[#allocation1 + $0x8] sm:$0xff pattern:$0x73625140]
    %347 = vrot.lane.b32.xlu0 %v343, 15
    %v348 = vpop.permute.xlu0 %347
    %349 = vrot.lane.b32.xlu0 %v344, 15
    %v350 = vpop.permute.xlu0 %349
    %vm351 = vcmp.lt.s32.totalorder %v153, 15
    %v352 = vsel %vm351, %v348, %v350
    %v353 = vsel %vm351, %v350, %v348
    %354 = vst [vmem:[#allocation1] ss:$4 sm:$0xff] %v121
    %v355 = vld.sshfl [vmem:[#allocation1] sm:$0xff pattern:$0x73625140]
    %v356 = vld.sshfl [vmem:[#allocation1 + $0x8] sm:$0xff pattern:$0x73625140]
    %359 = vrot.lane.b32.xlu0 %v355, 15
    %v360 = vpop.permute.xlu0 %359
    %361 = vrot.lane.b32.xlu0 %v356, 15
    %v362 = vpop.permute.xlu0 %361
    %v363 = vsel %vm351, %v360, %v362
    %v364 = vsel %vm351, %v362, %v360
    %365 = vst [vmem:[#allocation1] ss:$4 sm:$0xff] %v122
    %v366 = vld.sshfl [vmem:[#allocation1] sm:$0xff pattern:$0x73625140]
    %v367 = vld.sshfl [vmem:[#allocation1 + $0x8] sm:$0xff pattern:$0x73625140]
    %370 = vrot.lane.b32.xlu0 %v366, 15
    %v371 = vpop.permute.xlu0 %370
    %372 = vrot.lane.b32.xlu0 %v367, 15
    %v373 = vpop.permute.xlu0 %372
    %v374 = vsel %vm351, %v371, %v373
    %v375 = vsel %vm351, %v373, %v371
    %376 = vst [vmem:[#allocation1] ss:$4 sm:$0xff] %v123
    %v377 = vld.sshfl [vmem:[#allocation1] sm:$0xff pattern:$0x73625140]
    %v378 = vld.sshfl [vmem:[#allocation1 + $0x8] sm:$0xff pattern:$0x73625140]
    %381 = vrot.lane.b32.xlu0 %v377, 15
    %v382 = vpop.permute.xlu0 %381
    %383 = vrot.lane.b32.xlu0 %v378, 15
    %v384 = vpop.permute.xlu0 %383
    %v385 = vsel %vm351, %v382, %v384
    %v386 = vsel %vm351, %v384, %v382
    %s387 = sld [smem:[#allocation9 + $0x10]]
    %v388 = vstv %s387
    %v389 = vmul.f32 %v388, %v353
    %v390 = vmul.f32 %v388, %v352
    %s391 = sld [smem:[#allocation9 + $0x12]]
    %v392 = vstv %s391
    %v393 = vmul.f32 %v392, %v364
    %v394 = vmul.f32 %v392, %v363
    %v395 = vadd.f32 %v389, %v393
    %v396 = vadd.f32 %v390, %v394
    %s397 = sld [smem:[#allocation9 + $0x14]]
    %v398 = vstv %s397
    %v399 = vmul.f32 %v398, %v375
    %v400 = vmul.f32 %v398, %v374
    %v401 = vadd.f32 %v395, %v399
    %v402 = vadd.f32 %v396, %v400
    %s403 = sld [smem:[#allocation9 + $0x16]]
    %v404 = vstv %s403
    %v405 = vmul.f32 %v404, %v386
    %v406 = vmul.f32 %v404, %v385
    %v407 = vadd.f32 %v401, %v405
    %v408 = vadd.f32 %v402, %v406
    %v409 = vmul.f32 %v407, %v130
    %v410 = vmul.f32 %v408, %v131
    %v411 = vadd.f32 %v314, %v409
    %v412 = vadd.f32 %v315, %v410
    %s413 = sld [smem:[#allocation9 + $0x11]]
    %v414 = vstv %s413
    %v415 = vmul.f32 %v414, %v353
    %v416 = vmul.f32 %v414, %v352
    %s417 = sld [smem:[#allocation9 + $0x13]]
    %v418 = vstv %s417
    %v419 = vmul.f32 %v418, %v364
    %v420 = vmul.f32 %v418, %v363
    %v421 = vadd.f32 %v415, %v419
    %v422 = vadd.f32 %v416, %v420
    %s423 = sld [smem:[#allocation9 + $0x15]]
    %v424 = vstv %s423
    %v425 = vmul.f32 %v424, %v375
    %v426 = vmul.f32 %v424, %v374
    %v427 = vadd.f32 %v421, %v425
    %v428 = vadd.f32 %v422, %v426
    %s429 = sld [smem:[#allocation9 + $0x17]]
    %v430 = vstv %s429
    %v431 = vmul.f32 %v430, %v386
    %v432 = vmul.f32 %v430, %v385
    %v433 = vadd.f32 %v427, %v431
    %v434 = vadd.f32 %v428, %v432
    %v435 = vmul.f32 %v433, %v130
    %v436 = vmul.f32 %v434, %v131
    %v437 = vadd.f32 %v340, %v435
    %v438 = vadd.f32 %v341, %v436
    %439 = vst [vmem:[#allocation1] ss:$4 sm:$0xff] %v120
    %v440 = vld.sshfl [vmem:[#allocation1] sm:$0xff pattern:$0x73625140]
    %v441 = vld.sshfl [vmem:[#allocation1 + $0x8] sm:$0xff pattern:$0x73625140]
    %444 = vrot.lane.b32.xlu0 %v440, 1
    %v445 = vpop.permute.xlu0 %444
    %446 = vrot.lane.b32.xlu0 %v441, 1
    %v447 = vpop.permute.xlu0 %446
    %vm448 = vcmp.lt.s32.totalorder %v153, 1
    %v449 = vsel %vm448, %v445, %v447
    %v450 = vsel %vm448, %v447, %v445
    %451 = vst [vmem:[#allocation1] ss:$4 sm:$0xff] %v121
    %v452 = vld.sshfl [vmem:[#allocation1] sm:$0xff pattern:$0x73625140]
    %v453 = vld.sshfl [vmem:[#allocation1 + $0x8] sm:$0xff pattern:$0x73625140]
    %456 = vrot.lane.b32.xlu0 %v452, 1
    %v457 = vpop.permute.xlu0 %456
    %458 = vrot.lane.b32.xlu0 %v453, 1
    %v459 = vpop.permute.xlu0 %458
    %v460 = vsel %vm448, %v457, %v459
    %v461 = vsel %vm448, %v459, %v457
    %462 = vst [vmem:[#allocation1] ss:$4 sm:$0xff] %v122
    %v463 = vld.sshfl [vmem:[#allocation1] sm:$0xff pattern:$0x73625140]
    %v464 = vld.sshfl [vmem:[#allocation1 + $0x8] sm:$0xff pattern:$0x73625140]
    %467 = vrot.lane.b32.xlu0 %v463, 1
    %v468 = vpop.permute.xlu0 %467
    %469 = vrot.lane.b32.xlu0 %v464, 1
    %v470 = vpop.permute.xlu0 %469
    %v471 = vsel %vm448, %v468, %v470
    %v472 = vsel %vm448, %v470, %v468
    %473 = vst [vmem:[#allocation1] ss:$4 sm:$0xff] %v123
    %v474 = vld.sshfl [vmem:[#allocation1] sm:$0xff pattern:$0x73625140]
    %v475 = vld.sshfl [vmem:[#allocation1 + $0x8] sm:$0xff pattern:$0x73625140]
    %478 = vrot.lane.b32.xlu0 %v474, 1
    %v479 = vpop.permute.xlu0 %478
    %480 = vrot.lane.b32.xlu0 %v475, 1
    %v481 = vpop.permute.xlu0 %480
    %v482 = vsel %vm448, %v479, %v481
    %v483 = vsel %vm448, %v481, %v479
    %s484 = sld [smem:[#allocation9 + $0x18]]
    %v485 = vstv %s484
    %v486 = vmul.f32 %v485, %v450
    %v487 = vmul.f32 %v485, %v449
    %s488 = sld [smem:[#allocation9 + $0x1a]]
    %v489 = vstv %s488
    %v490 = vmul.f32 %v489, %v461
    %v491 = vmul.f32 %v489, %v460
    %v492 = vadd.f32 %v486, %v490
    %v493 = vadd.f32 %v487, %v491
    %s494 = sld [smem:[#allocation9 + $0x1c]]
    %v495 = vstv %s494
    %v496 = vmul.f32 %v495, %v472
    %v497 = vmul.f32 %v495, %v471
    %v498 = vadd.f32 %v492, %v496
    %v499 = vadd.f32 %v493, %v497
    %s500 = sld [smem:[#allocation9 + $0x1e]]
    %v501 = vstv %s500
    %v502 = vmul.f32 %v501, %v483
    %v503 = vmul.f32 %v501, %v482
    %v504 = vadd.f32 %v498, %v502
    %v505 = vadd.f32 %v499, %v503
    %v506 = vmul.f32 %v504, %v132
    %v507 = vmul.f32 %v505, %v133
    %v508 = vadd.f32 %v411, %v506
    %v509 = vadd.f32 %v412, %v507
    %s510 = sld [smem:[#allocation9 + $0x19]]
    %v511 = vstv %s510
    %v512 = vmul.f32 %v511, %v450
    %v513 = vmul.f32 %v511, %v449
    %s514 = sld [smem:[#allocation9 + $0x1b]]
    %v515 = vstv %s514
    %v516 = vmul.f32 %v515, %v461
    %v517 = vmul.f32 %v515, %v460
    %v518 = vadd.f32 %v512, %v516
    %v519 = vadd.f32 %v513, %v517
    %s520 = sld [smem:[#allocation9 + $0x1d]]
    %v521 = vstv %s520
    %v522 = vmul.f32 %v521, %v472
    %v523 = vmul.f32 %v521, %v471
    %v524 = vadd.f32 %v518, %v522
    %v525 = vadd.f32 %v519, %v523
    %s526 = sld [smem:[#allocation9 + $0x1f]]
    %v527 = vstv %s526
    %v528 = vmul.f32 %v527, %v483
    %v529 = vmul.f32 %v527, %v482
    %v530 = vadd.f32 %v524, %v528
    %v531 = vadd.f32 %v525, %v529
    %v532 = vmul.f32 %v530, %v132
    %v533 = vmul.f32 %v531, %v133
    %v534 = vadd.f32 %v437, %v532
    %v535 = vadd.f32 %v438, %v533
    %s536 = sld [smem:[#allocation9 + $0x20]]
    %v537 = vstv %s536
    %v538 = vmul.f32 %v537, %v120
    %s539 = sld [smem:[#allocation9 + $0x22]]
    %v540 = vstv %s539
    %v541 = vmul.f32 %v540, %v121
    %v542 = vadd.f32 %v538, %v541
    %s543 = sld [smem:[#allocation9 + $0x24]]
    %v544 = vstv %s543
    %v545 = vmul.f32 %v544, %v122
    %v546 = vadd.f32 %v542, %v545
    %s547 = sld [smem:[#allocation9 + $0x26]]
    %v548 = vstv %s547
    %v549 = vmul.f32 %v548, %v123
    %v550 = vadd.f32 %v546, %v549
    %552 = vst [vmem:[#allocation1] ss:$4 sm:$0xff] %v550
    %v553 = vld.sshfl [vmem:[#allocation1] sm:$0xff pattern:$0x73625140]
    %v554 = vld.sshfl [vmem:[#allocation1 + $0x8] sm:$0xff pattern:$0x73625140]
    %v557 = vadd.f32 %v508, %v553
    %v558 = vadd.f32 %v509, %v554
    %s559 = sld [smem:[#allocation9 + $0x21]]
    %v560 = vstv %s559
    %v561 = vmul.f32 %v560, %v120
    %s562 = sld [smem:[#allocation9 + $0x23]]
    %v563 = vstv %s562
    %v564 = vmul.f32 %v563, %v121
    %v565 = vadd.f32 %v561, %v564
    %s566 = sld [smem:[#allocation9 + $0x25]]
    %v567 = vstv %s566
    %v568 = vmul.f32 %v567, %v122
    %v569 = vadd.f32 %v565, %v568
    %s570 = sld [smem:[#allocation9 + $0x27]]
    %v571 = vstv %s570
    %v572 = vmul.f32 %v571, %v123
    %v573 = vadd.f32 %v569, %v572
    %575 = vst [vmem:[#allocation1] ss:$4 sm:$0xff] %v573
    %v576 = vld.sshfl [vmem:[#allocation1] sm:$0xff pattern:$0x73625140]
    %v577 = vld.sshfl [vmem:[#allocation1 + $0x8] sm:$0xff pattern:$0x73625140]
    %v580 = vadd.f32 %v534, %v576
    %v581 = vadd.f32 %v535, %v577
    %582 = vst [vmem:[#allocation1] ss:$4 sm:$0xff] %v120
    %v583 = vld.sshfl [vmem:[#allocation1] sm:$0xff pattern:$0x73625140]
    %v584 = vld.sshfl [vmem:[#allocation1 + $0x8] sm:$0xff pattern:$0x73625140]
    %587 = vrot.lane.b32.xlu0 %v583, 127
    %v588 = vpop.permute.xlu0 %587
    %589 = vrot.lane.b32.xlu0 %v584, 127
    %v590 = vpop.permute.xlu0 %589
    %vm591 = vcmp.lt.s32.totalorder %v153, 127
    %v592 = vsel %vm591, %v588, %v590
    %v593 = vsel %vm591, %v590, %v588
    %594 = vst [vmem:[#allocation1] ss:$4 sm:$0xff] %v121
    %v595 = vld.sshfl [vmem:[#allocation1] sm:$0xff pattern:$0x73625140]
    %v596 = vld.sshfl [vmem:[#allocation1 + $0x8] sm:$0xff pattern:$0x73625140]
    %599 = vrot.lane.b32.xlu0 %v595, 127
    %v600 = vpop.permute.xlu0 %599
    %601 = vrot.lane.b32.xlu0 %v596, 127
    %v602 = vpop.permute.xlu0 %601
    %v603 = vsel %vm591, %v600, %v602
    %v604 = vsel %vm591, %v602, %v600
    %605 = vst [vmem:[#allocation1] ss:$4 sm:$0xff] %v122
    %v606 = vld.sshfl [vmem:[#allocation1] sm:$0xff pattern:$0x73625140]
    %v607 = vld.sshfl [vmem:[#allocation1 + $0x8] sm:$0xff pattern:$0x73625140]
    %610 = vrot.lane.b32.xlu0 %v606, 127
    %v611 = vpop.permute.xlu0 %610
    %612 = vrot.lane.b32.xlu0 %v607, 127
    %v613 = vpop.permute.xlu0 %612
    %v614 = vsel %vm591, %v611, %v613
    %v615 = vsel %vm591, %v613, %v611
    %616 = vst [vmem:[#allocation1] ss:$4 sm:$0xff] %v123
    %v617 = vld.sshfl [vmem:[#allocation1] sm:$0xff pattern:$0x73625140]
    %v618 = vld.sshfl [vmem:[#allocation1 + $0x8] sm:$0xff pattern:$0x73625140]
    %621 = vrot.lane.b32.xlu0 %v617, 127
    %v622 = vpop.permute.xlu0 %621
    %623 = vrot.lane.b32.xlu0 %v618, 127
    %v624 = vpop.permute.xlu0 %623
    %v625 = vsel %vm591, %v622, %v624
    %v626 = vsel %vm591, %v624, %v622
    %s627 = sld [smem:[#allocation9 + $0x28]]
    %v628 = vstv %s627
    %v629 = vmul.f32 %v628, %v592
    %v630 = vmul.f32 %v628, %v593
    %s631 = sld [smem:[#allocation9 + $0x2a]]
    %v632 = vstv %s631
    %v633 = vmul.f32 %v632, %v603
    %v634 = vmul.f32 %v632, %v604
    %v635 = vadd.f32 %v629, %v633
    %v636 = vadd.f32 %v630, %v634
    %s637 = sld [smem:[#allocation9 + $0x2c]]
    %v638 = vstv %s637
    %v639 = vmul.f32 %v638, %v614
    %v640 = vmul.f32 %v638, %v615
    %v641 = vadd.f32 %v635, %v639
    %v642 = vadd.f32 %v636, %v640
    %s643 = sld [smem:[#allocation9 + $0x2e]]
    %v644 = vstv %s643
    %v645 = vmul.f32 %v644, %v625
    %v646 = vmul.f32 %v644, %v626
    %v647 = vadd.f32 %v641, %v645
    %v648 = vadd.f32 %v642, %v646
    %v649 = vmul.f32 %v647, %v134
    %v650 = vmul.f32 %v648, %v135
    %v651 = vadd.f32 %v557, %v649
    %v652 = vadd.f32 %v558, %v650
    %s653 = sld [smem:[#allocation9 + $0x29]]
    %v654 = vstv %s653
    %v655 = vmul.f32 %v654, %v592
    %v656 = vmul.f32 %v654, %v593
    %s657 = sld [smem:[#allocation9 + $0x2b]]
    %v658 = vstv %s657
    %v659 = vmul.f32 %v658, %v603
    %v660 = vmul.f32 %v658, %v604
    %v661 = vadd.f32 %v655, %v659
    %v662 = vadd.f32 %v656, %v660
    %s663 = sld [smem:[#allocation9 + $0x2d]]
    %v664 = vstv %s663
    %v665 = vmul.f32 %v664, %v614
    %v666 = vmul.f32 %v664, %v615
    %v667 = vadd.f32 %v661, %v665
    %v668 = vadd.f32 %v662, %v666
    %s669 = sld [smem:[#allocation9 + $0x2f]]
    %v670 = vstv %s669
    %v671 = vmul.f32 %v670, %v625
    %v672 = vmul.f32 %v670, %v626
    %v673 = vadd.f32 %v667, %v671
    %v674 = vadd.f32 %v668, %v672
    %v675 = vmul.f32 %v673, %v134
    %v676 = vmul.f32 %v674, %v135
    %v677 = vadd.f32 %v580, %v675
    %v678 = vadd.f32 %v581, %v676
    %679 = vst [vmem:[#allocation1] ss:$4 sm:$0xff] %v120
    %v680 = vld.sshfl [vmem:[#allocation1] sm:$0xff pattern:$0x73625140]
    %v681 = vld.sshfl [vmem:[#allocation1 + $0x8] sm:$0xff pattern:$0x73625140]
    %684 = vrot.lane.b32.xlu0 %v680, 113
    %v685 = vpop.permute.xlu0 %684
    %686 = vrot.lane.b32.xlu0 %v681, 113
    %v687 = vpop.permute.xlu0 %686
    %vm688 = vcmp.lt.s32.totalorder %v153, 113
    %v689 = vsel %vm688, %v685, %v687
    %v690 = vsel %vm688, %v687, %v685
    %691 = vst [vmem:[#allocation1] ss:$4 sm:$0xff] %v121
    %v692 = vld.sshfl [vmem:[#allocation1] sm:$0xff pattern:$0x73625140]
    %v693 = vld.sshfl [vmem:[#allocation1 + $0x8] sm:$0xff pattern:$0x73625140]
    %696 = vrot.lane.b32.xlu0 %v692, 113
    %v697 = vpop.permute.xlu0 %696
    %698 = vrot.lane.b32.xlu0 %v693, 113
    %v699 = vpop.permute.xlu0 %698
    %v700 = vsel %vm688, %v697, %v699
    %v701 = vsel %vm688, %v699, %v697
    %702 = vst [vmem:[#allocation1] ss:$4 sm:$0xff] %v122
    %v703 = vld.sshfl [vmem:[#allocation1] sm:$0xff pattern:$0x73625140]
    %v704 = vld.sshfl [vmem:[#allocation1 + $0x8] sm:$0xff pattern:$0x73625140]
    %707 = vrot.lane.b32.xlu0 %v703, 113
    %v708 = vpop.permute.xlu0 %707
    %709 = vrot.lane.b32.xlu0 %v704, 113
    %v710 = vpop.permute.xlu0 %709
    %v711 = vsel %vm688, %v708, %v710
    %v712 = vsel %vm688, %v710, %v708
    %713 = vst [vmem:[#allocation1] ss:$4 sm:$0xff] %v123
    %v714 = vld.sshfl [vmem:[#allocation1] sm:$0xff pattern:$0x73625140]
    %v715 = vld.sshfl [vmem:[#allocation1 + $0x8] sm:$0xff pattern:$0x73625140]
    %718 = vrot.lane.b32.xlu0 %v714, 113
    %v719 = vpop.permute.xlu0 %718
    %720 = vrot.lane.b32.xlu0 %v715, 113
    %v721 = vpop.permute.xlu0 %720
    %v722 = vsel %vm688, %v719, %v721
    %v723 = vsel %vm688, %v721, %v719
    %s724 = sld [smem:[#allocation9 + $0x30]]
    %v725 = vstv %s724
    %v726 = vmul.f32 %v725, %v689
    %v727 = vmul.f32 %v725, %v690
    %s728 = sld [smem:[#allocation9 + $0x32]]
    %v729 = vstv %s728
    %v730 = vmul.f32 %v729, %v700
    %v731 = vmul.f32 %v729, %v701
    %v732 = vadd.f32 %v726, %v730
    %v733 = vadd.f32 %v727, %v731
    %s734 = sld [smem:[#allocation9 + $0x34]]
    %v735 = vstv %s734
    %v736 = vmul.f32 %v735, %v711
    %v737 = vmul.f32 %v735, %v712
    %v738 = vadd.f32 %v732, %v736
    %v739 = vadd.f32 %v733, %v737
    %s740 = sld [smem:[#allocation9 + $0x36]]
    %v741 = vstv %s740
    %v742 = vmul.f32 %v741, %v722
    %v743 = vmul.f32 %v741, %v723
    %v744 = vadd.f32 %v738, %v742
    %v745 = vadd.f32 %v739, %v743
    %v746 = vmul.f32 %v744, %v136
    %v747 = vmul.f32 %v745, %v137
    %v748 = vadd.f32 %v651, %v746
    %v749 = vadd.f32 %v652, %v747
    %s750 = sld [smem:[#allocation9 + $0x31]]
    %v751 = vstv %s750
    %v752 = vmul.f32 %v751, %v689
    %v753 = vmul.f32 %v751, %v690
    %s754 = sld [smem:[#allocation9 + $0x33]]
    %v755 = vstv %s754
    %v756 = vmul.f32 %v755, %v700
    %v757 = vmul.f32 %v755, %v701
    %v758 = vadd.f32 %v752, %v756
    %v759 = vadd.f32 %v753, %v757
    %s760 = sld [smem:[#allocation9 + $0x35]]
    %v761 = vstv %s760
    %v762 = vmul.f32 %v761, %v711
    %v763 = vmul.f32 %v761, %v712
    %v764 = vadd.f32 %v758, %v762
    %v765 = vadd.f32 %v759, %v763
    %s766 = sld [smem:[#allocation9 + $0x37]]
    %v767 = vstv %s766
    %v768 = vmul.f32 %v767, %v722
    %v769 = vmul.f32 %v767, %v723
    %v770 = vadd.f32 %v764, %v768
    %v771 = vadd.f32 %v765, %v769
    %v772 = vmul.f32 %v770, %v136
    %v773 = vmul.f32 %v771, %v137
    %v774 = vadd.f32 %v677, %v772
    %v775 = vadd.f32 %v678, %v773
    %776 = vst [vmem:[#allocation1] ss:$4 sm:$0xff] %v120
    %v777 = vld.sshfl [vmem:[#allocation1] sm:$0xff pattern:$0x73625140]
    %v778 = vld.sshfl [vmem:[#allocation1 + $0x8] sm:$0xff pattern:$0x73625140]
    %781 = vrot.lane.b32.xlu0 %v777, 112
    %v782 = vpop.permute.xlu0 %781
    %783 = vrot.lane.b32.xlu0 %v778, 112
    %v784 = vpop.permute.xlu0 %783
    %vm785 = vcmp.lt.s32.totalorder %v153, 112
    %v786 = vsel %vm785, %v782, %v784
    %v787 = vsel %vm785, %v784, %v782
    %788 = vst [vmem:[#allocation1] ss:$4 sm:$0xff] %v121
    %v789 = vld.sshfl [vmem:[#allocation1] sm:$0xff pattern:$0x73625140]
    %v790 = vld.sshfl [vmem:[#allocation1 + $0x8] sm:$0xff pattern:$0x73625140]
    %793 = vrot.lane.b32.xlu0 %v789, 112
    %v794 = vpop.permute.xlu0 %793
    %795 = vrot.lane.b32.xlu0 %v790, 112
    %v796 = vpop.permute.xlu0 %795
    %v797 = vsel %vm785, %v794, %v796
    %v798 = vsel %vm785, %v796, %v794
    %799 = vst [vmem:[#allocation1] ss:$4 sm:$0xff] %v122
    %v800 = vld.sshfl [vmem:[#allocation1] sm:$0xff pattern:$0x73625140]
    %v801 = vld.sshfl [vmem:[#allocation1 + $0x8] sm:$0xff pattern:$0x73625140]
    %804 = vrot.lane.b32.xlu0 %v800, 112
    %v805 = vpop.permute.xlu0 %804
    %806 = vrot.lane.b32.xlu0 %v801, 112
    %v807 = vpop.permute.xlu0 %806
    %v808 = vsel %vm785, %v805, %v807
    %v809 = vsel %vm785, %v807, %v805
    %810 = vst [vmem:[#allocation1] ss:$4 sm:$0xff] %v123
    %v811 = vld.sshfl [vmem:[#allocation1] sm:$0xff pattern:$0x73625140]
    %v812 = vld.sshfl [vmem:[#allocation1 + $0x8] sm:$0xff pattern:$0x73625140]
    %815 = vrot.lane.b32.xlu0 %v811, 112
    %v816 = vpop.permute.xlu0 %815
    %817 = vrot.lane.b32.xlu0 %v812, 112
    %v818 = vpop.permute.xlu0 %817
    %v819 = vsel %vm785, %v816, %v818
    %v820 = vsel %vm785, %v818, %v816
    %s821 = sld [smem:[#allocation9 + $0x38]]
    %v822 = vstv %s821
    %v823 = vmul.f32 %v822, %v786
    %v824 = vmul.f32 %v822, %v787
    %s825 = sld [smem:[#allocation9 + $0x3a]]
    %v826 = vstv %s825
    %v827 = vmul.f32 %v826, %v797
    %v828 = vmul.f32 %v826, %v798
    %v829 = vadd.f32 %v823, %v827
    %v830 = vadd.f32 %v824, %v828
    %s831 = sld [smem:[#allocation9 + $0x3c]]
    %v832 = vstv %s831
    %v833 = vmul.f32 %v832, %v808
    %v834 = vmul.f32 %v832, %v809
    %v835 = vadd.f32 %v829, %v833
    %v836 = vadd.f32 %v830, %v834
    %s837 = sld [smem:[#allocation9 + $0x3e]]
    %v838 = vstv %s837
    %v839 = vmul.f32 %v838, %v819
    %v840 = vmul.f32 %v838, %v820
    %v841 = vadd.f32 %v835, %v839
    %v842 = vadd.f32 %v836, %v840
    %v843 = vmul.f32 %v841, %v138
    %v844 = vmul.f32 %v842, %v139
    %v845 = vadd.f32 %v748, %v843
    %v846 = vadd.f32 %v749, %v844
    %s847 = sld [smem:[#allocation9 + $0x39]]
    %v848 = vstv %s847
    %v849 = vmul.f32 %v848, %v786
    %v850 = vmul.f32 %v848, %v787
    %s851 = sld [smem:[#allocation9 + $0x3b]]
    %v852 = vstv %s851
    %v853 = vmul.f32 %v852, %v797
    %v854 = vmul.f32 %v852, %v798
    %v855 = vadd.f32 %v849, %v853
    %v856 = vadd.f32 %v850, %v854
    %s857 = sld [smem:[#allocation9 + $0x3d]]
    %v858 = vstv %s857
    %v859 = vmul.f32 %v858, %v808
    %v860 = vmul.f32 %v858, %v809
    %v861 = vadd.f32 %v855, %v859
    %v862 = vadd.f32 %v856, %v860
    %s863 = sld [smem:[#allocation9 + $0x3f]]
    %v864 = vstv %s863
    %v865 = vmul.f32 %v864, %v819
    %v866 = vmul.f32 %v864, %v820
    %v867 = vadd.f32 %v861, %v865
    %v868 = vadd.f32 %v862, %v866
    %v869 = vmul.f32 %v867, %v138
    %v870 = vmul.f32 %v868, %v139
    %v871 = vadd.f32 %v774, %v869
    %v872 = vadd.f32 %v775, %v870
    %873 = vst [vmem:[#allocation1] ss:$4 sm:$0xff] %v120
    %v874 = vld.sshfl [vmem:[#allocation1] sm:$0xff pattern:$0x73625140]
    %v875 = vld.sshfl [vmem:[#allocation1 + $0x8] sm:$0xff pattern:$0x73625140]
    %878 = vrot.lane.b32.xlu0 %v874, 111
    %v879 = vpop.permute.xlu0 %878
    %880 = vrot.lane.b32.xlu0 %v875, 111
    %v881 = vpop.permute.xlu0 %880
    %vm882 = vcmp.lt.s32.totalorder %v153, 111
    %v883 = vsel %vm882, %v879, %v881
    %v884 = vsel %vm882, %v881, %v879
    %885 = vst [vmem:[#allocation1] ss:$4 sm:$0xff] %v121
    %v886 = vld.sshfl [vmem:[#allocation1] sm:$0xff pattern:$0x73625140]
    %v887 = vld.sshfl [vmem:[#allocation1 + $0x8] sm:$0xff pattern:$0x73625140]
    %890 = vrot.lane.b32.xlu0 %v886, 111
    %v891 = vpop.permute.xlu0 %890
    %892 = vrot.lane.b32.xlu0 %v887, 111
    %v893 = vpop.permute.xlu0 %892
    %v894 = vsel %vm882, %v891, %v893
    %v895 = vsel %vm882, %v893, %v891
    %896 = vst [vmem:[#allocation1] ss:$4 sm:$0xff] %v122
    %v897 = vld.sshfl [vmem:[#allocation1] sm:$0xff pattern:$0x73625140]
    %v898 = vld.sshfl [vmem:[#allocation1 + $0x8] sm:$0xff pattern:$0x73625140]
    %901 = vrot.lane.b32.xlu0 %v897, 111
    %v902 = vpop.permute.xlu0 %901
    %903 = vrot.lane.b32.xlu0 %v898, 111
    %v904 = vpop.permute.xlu0 %903
    %v905 = vsel %vm882, %v902, %v904
    %v906 = vsel %vm882, %v904, %v902
    %907 = vst [vmem:[#allocation1] ss:$4 sm:$0xff] %v123
    %v908 = vld.sshfl [vmem:[#allocation1] sm:$0xff pattern:$0x73625140]
    %v909 = vld.sshfl [vmem:[#allocation1 + $0x8] sm:$0xff pattern:$0x73625140]
    %912 = vrot.lane.b32.xlu0 %v908, 111
    %v913 = vpop.permute.xlu0 %912
    %914 = vrot.lane.b32.xlu0 %v909, 111
    %v915 = vpop.permute.xlu0 %914
    %v916 = vsel %vm882, %v913, %v915
    %v917 = vsel %vm882, %v915, %v913
    %s918 = sld [smem:[#allocation9 + $0x40]]
    %v919 = vstv %s918
    %v920 = vmul.f32 %v919, %v883
    %v921 = vmul.f32 %v919, %v884
    %s922 = sld [smem:[#allocation9 + $0x42]]
    %v923 = vstv %s922
    %v924 = vmul.f32 %v923, %v894
    %v925 = vmul.f32 %v923, %v895
    %v926 = vadd.f32 %v920, %v924
    %v927 = vadd.f32 %v921, %v925
    %s928 = sld [smem:[#allocation9 + $0x44]]
    %v929 = vstv %s928
    %v930 = vmul.f32 %v929, %v905
    %v931 = vmul.f32 %v929, %v906
    %v932 = vadd.f32 %v926, %v930
    %v933 = vadd.f32 %v927, %v931
    %s934 = sld [smem:[#allocation9 + $0x46]]
    %v935 = vstv %s934
    %v936 = vmul.f32 %v935, %v916
    %v937 = vmul.f32 %v935, %v917
    %v938 = vadd.f32 %v932, %v936
    %v939 = vadd.f32 %v933, %v937
    %v940 = vmul.f32 %v938, %v140
    %v941 = vmul.f32 %v939, %v141
    %v942 = vadd.f32 %v845, %v940
    %v943 = vadd.f32 %v846, %v941
    %s944 = sld [smem:[#allocation9 + $0x41]]
    %v945 = vstv %s944
    %v946 = vmul.f32 %v945, %v883
    %v947 = vmul.f32 %v945, %v884
    %s948 = sld [smem:[#allocation9 + $0x43]]
    %v949 = vstv %s948
    %v950 = vmul.f32 %v949, %v894
    %v951 = vmul.f32 %v949, %v895
    %v952 = vadd.f32 %v946, %v950
    %v953 = vadd.f32 %v947, %v951
    %s954 = sld [smem:[#allocation9 + $0x45]]
    %v955 = vstv %s954
    %v956 = vmul.f32 %v955, %v905
    %v957 = vmul.f32 %v955, %v906
    %v958 = vadd.f32 %v952, %v956
    %v959 = vadd.f32 %v953, %v957
    %s960 = sld [smem:[#allocation9 + $0x47]]
    %v961 = vstv %s960
    %v962 = vmul.f32 %v961, %v916
    %v963 = vmul.f32 %v961, %v917
    %v964 = vadd.f32 %v958, %v962
    %v965 = vadd.f32 %v959, %v963
    %v966 = vmul.f32 %v964, %v140
    %v967 = vmul.f32 %v965, %v141
    %v968 = vadd.f32 %v871, %v966
    %v969 = vadd.f32 %v872, %v967
    %s970 = sld [smem:[#allocation10]]
    %v971 = vstv %s970
    %v972 = vadd.f32 %v942, %v971
    %v973 = vadd.f32 %v943, %v971
    %v974 = vmax.f32 %v972, 0.0
    %v975 = vmax.f32 %v973, 0.0
    %s976 = sld [smem:[#allocation10 + $0x1]]
    %v977 = vstv %s976
    %v978 = vadd.f32 %v968, %v977
    %v979 = vadd.f32 %v969, %v977
    %v980 = vmax.f32 %v978, 0.0
    %v981 = vmax.f32 %v979, 0.0
    %982 = vrot.lane.b32.xlu0 %v974, 17
    %v983 = vpop.permute.xlu0 %982
    %984 = vrot.lane.b32.xlu0 %v975, 17
    %v985 = vpop.permute.xlu0 %984
    %v986 = vsel %vm154, %v983, %v985
    %v987 = vsel %vm154, %v985, %v983
    %988 = vrot.lane.b32.xlu0 %v980, 17
    %v989 = vpop.permute.xlu0 %988
    %990 = vrot.lane.b32.xlu0 %v981, 17
    %v991 = vpop.permute.xlu0 %990
    %v992 = vsel %vm154, %v989, %v991
    %v993 = vsel %vm154, %v991, %v989
    %s994 = sld [smem:[#allocation12]]
    %v995 = vstv %s994
    %v996 = vmul.f32 %v995, %v987
    %v997 = vmul.f32 %v995, %v986
    %s998 = sld [smem:[#allocation12 + $0x2]]
    %v999 = vstv %s998
    %v1000 = vmul.f32 %v999, %v993
    %v1001 = vmul.f32 %v999, %v992
    %v1002 = vadd.f32 %v996, %v1000
    %v1003 = vadd.f32 %v997, %v1001
    %v1004 = vmul.f32 %v1002, %v126
    %v1005 = vmul.f32 %v1003, %v127
    %v1006 = vadd.f32 %v1004, 0.0
    %v1007 = vadd.f32 %v1005, 0.0
    %s1008 = sld [smem:[#allocation12 + $0x1]]
    %v1009 = vstv %s1008
    %v1010 = vmul.f32 %v1009, %v987
    %v1011 = vmul.f32 %v1009, %v986
    %s1012 = sld [smem:[#allocation12 + $0x3]]
    %v1013 = vstv %s1012
    %v1014 = vmul.f32 %v1013, %v993
    %v1015 = vmul.f32 %v1013, %v992
    %v1016 = vadd.f32 %v1010, %v1014
    %v1017 = vadd.f32 %v1011, %v1015
    %v1018 = vmul.f32 %v1016, %v126
    %v1019 = vmul.f32 %v1017, %v127
    %v1020 = vadd.f32 %v1018, 0.0
    %v1021 = vadd.f32 %v1019, 0.0
    %1022 = vrot.lane.b32.xlu0 %v974, 16
    %v1023 = vpop.permute.xlu0 %1022
    %1024 = vrot.lane.b32.xlu0 %v975, 16
    %v1025 = vpop.permute.xlu0 %1024
    %v1026 = vsel %vm254, %v1023, %v1025
    %v1027 = vsel %vm254, %v1025, %v1023
    %1028 = vrot.lane.b32.xlu0 %v980, 16
    %v1029 = vpop.permute.xlu0 %1028
    %1030 = vrot.lane.b32.xlu0 %v981, 16
    %v1031 = vpop.permute.xlu0 %1030
    %v1032 = vsel %vm254, %v1029, %v1031
    %v1033 = vsel %vm254, %v1031, %v1029
    %s1034 = sld [smem:[#allocation12 + $0x4]]
    %v1035 = vstv %s1034
    %v1036 = vmul.f32 %v1035, %v1027
    %v1037 = vmul.f32 %v1035, %v1026
    %s1038 = sld [smem:[#allocation12 + $0x6]]
    %v1039 = vstv %s1038
    %v1040 = vmul.f32 %v1039, %v1033
    %v1041 = vmul.f32 %v1039, %v1032
    %v1042 = vadd.f32 %v1036, %v1040
    %v1043 = vadd.f32 %v1037, %v1041
    %v1044 = vmul.f32 %v1042, %v128
    %v1045 = vmul.f32 %v1043, %v129
    %v1046 = vadd.f32 %v1006, %v1044
    %v1047 = vadd.f32 %v1007, %v1045
    %s1048 = sld [smem:[#allocation12 + $0x5]]
    %v1049 = vstv %s1048
    %v1050 = vmul.f32 %v1049, %v1027
    %v1051 = vmul.f32 %v1049, %v1026
    %s1052 = sld [smem:[#allocation12 + $0x7]]
    %v1053 = vstv %s1052
    %v1054 = vmul.f32 %v1053, %v1033
    %v1055 = vmul.f32 %v1053, %v1032
    %v1056 = vadd.f32 %v1050, %v1054
    %v1057 = vadd.f32 %v1051, %v1055
    %v1058 = vmul.f32 %v1056, %v128
    %v1059 = vmul.f32 %v1057, %v129
    %v1060 = vadd.f32 %v1020, %v1058
    %v1061 = vadd.f32 %v1021, %v1059
    %1062 = vrot.lane.b32.xlu0 %v974, 15
    %v1063 = vpop.permute.xlu0 %1062
    %1064 = vrot.lane.b32.xlu0 %v975, 15
    %v1065 = vpop.permute.xlu0 %1064
    %v1066 = vsel %vm351, %v1063, %v1065
    %v1067 = vsel %vm351, %v1065, %v1063
    %1068 = vrot.lane.b32.xlu0 %v980, 15
    %v1069 = vpop.permute.xlu0 %1068
    %1070 = vrot.lane.b32.xlu0 %v981, 15
    %v1071 = vpop.permute.xlu0 %1070
    %v1072 = vsel %vm351, %v1069, %v1071
    %v1073 = vsel %vm351, %v1071, %v1069
    %s1074 = sld [smem:[#allocation12 + $0x8]]
    %v1075 = vstv %s1074
    %v1076 = vmul.f32 %v1075, %v1067
    %v1077 = vmul.f32 %v1075, %v1066
    %s1078 = sld [smem:[#allocation12 + $0xa]]
    %v1079 = vstv %s1078
    %v1080 = vmul.f32 %v1079, %v1073
    %v1081 = vmul.f32 %v1079, %v1072
    %v1082 = vadd.f32 %v1076, %v1080
    %v1083 = vadd.f32 %v1077, %v1081
    %v1084 = vmul.f32 %v1082, %v130
    %v1085 = vmul.f32 %v1083, %v131
    %v1086 = vadd.f32 %v1046, %v1084
    %v1087 = vadd.f32 %v1047, %v1085
    %s1088 = sld [smem:[#allocation12 + $0x9]]
    %v1089 = vstv %s1088
    %v1090 = vmul.f32 %v1089, %v1067
    %v1091 = vmul.f32 %v1089, %v1066
    %s1092 = sld [smem:[#allocation12 + $0xb]]
    %v1093 = vstv %s1092
    %v1094 = vmul.f32 %v1093, %v1073
    %v1095 = vmul.f32 %v1093, %v1072
    %v1096 = vadd.f32 %v1090, %v1094
    %v1097 = vadd.f32 %v1091, %v1095
    %v1098 = vmul.f32 %v1096, %v130
    %v1099 = vmul.f32 %v1097, %v131
    %v1100 = vadd.f32 %v1060, %v1098
    %v1101 = vadd.f32 %v1061, %v1099
    %1102 = vrot.lane.b32.xlu0 %v974, 1
    %v1103 = vpop.permute.xlu0 %1102
    %1104 = vrot.lane.b32.xlu0 %v975, 1
    %v1105 = vpop.permute.xlu0 %1104
    %v1106 = vsel %vm448, %v1103, %v1105
    %v1107 = vsel %vm448, %v1105, %v1103
    %1108 = vrot.lane.b32.xlu0 %v980, 1
    %v1109 = vpop.permute.xlu0 %1108
    %1110 = vrot.lane.b32.xlu0 %v981, 1
    %v1111 = vpop.permute.xlu0 %1110
    %v1112 = vsel %vm448, %v1109, %v1111
    %v1113 = vsel %vm448, %v1111, %v1109
    %s1114 = sld [smem:[#allocation12 + $0xc]]
    %v1115 = vstv %s1114
    %v1116 = vmul.f32 %v1115, %v1107
    %v1117 = vmul.f32 %v1115, %v1106
    %s1118 = sld [smem:[#allocation12 + $0xe]]
    %v1119 = vstv %s1118
    %v1120 = vmul.f32 %v1119, %v1113
    %v1121 = vmul.f32 %v1119, %v1112
    %v1122 = vadd.f32 %v1116, %v1120
    %v1123 = vadd.f32 %v1117, %v1121
    %v1124 = vmul.f32 %v1122, %v132
    %v1125 = vmul.f32 %v1123, %v133
    %v1126 = vadd.f32 %v1086, %v1124
    %v1127 = vadd.f32 %v1087, %v1125
    %s1128 = sld [smem:[#allocation12 + $0xd]]
    %v1129 = vstv %s1128
    %v1130 = vmul.f32 %v1129, %v1107
    %v1131 = vmul.f32 %v1129, %v1106
    %s1132 = sld [smem:[#allocation12 + $0xf]]
    %v1133 = vstv %s1132
    %v1134 = vmul.f32 %v1133, %v1113
    %v1135 = vmul.f32 %v1133, %v1112
    %v1136 = vadd.f32 %v1130, %v1134
    %v1137 = vadd.f32 %v1131, %v1135
    %v1138 = vmul.f32 %v1136, %v132
    %v1139 = vmul.f32 %v1137, %v133
    %v1140 = vadd.f32 %v1100, %v1138
    %v1141 = vadd.f32 %v1101, %v1139
    %s1142 = sld [smem:[#allocation12 + $0x10]]
    %v1143 = vstv %s1142
    %v1144 = vmul.f32 %v1143, %v974
    %v1145 = vmul.f32 %v1143, %v975
    %s1146 = sld [smem:[#allocation12 + $0x12]]
    %v1147 = vstv %s1146
    %v1148 = vmul.f32 %v1147, %v980
    %v1149 = vmul.f32 %v1147, %v981
    %v1150 = vadd.f32 %v1144, %v1148
    %v1151 = vadd.f32 %v1145, %v1149
    %v1152 = vadd.f32 %v1126, %v1150
    %v1153 = vadd.f32 %v1127, %v1151
    %s1154 = sld [smem:[#allocation12 + $0x11]]
    %v1155 = vstv %s1154
    %v1156 = vmul.f32 %v1155, %v974
    %v1157 = vmul.f32 %v1155, %v975
    %s1158 = sld [smem:[#allocation12 + $0x13]]
    %v1159 = vstv %s1158
    %v1160 = vmul.f32 %v1159, %v980
    %v1161 = vmul.f32 %v1159, %v981
    %v1162 = vadd.f32 %v1156, %v1160
    %v1163 = vadd.f32 %v1157, %v1161
    %v1164 = vadd.f32 %v1140, %v1162
    %v1165 = vadd.f32 %v1141, %v1163
    %1166 = vrot.lane.b32.xlu0 %v974, 127
    %v1167 = vpop.permute.xlu0 %1166
    %1168 = vrot.lane.b32.xlu0 %v975, 127
    %v1169 = vpop.permute.xlu0 %1168
    %v1170 = vsel %vm591, %v1167, %v1169
    %v1171 = vsel %vm591, %v1169, %v1167
    %1172 = vrot.lane.b32.xlu0 %v980, 127
    %v1173 = vpop.permute.xlu0 %1172
    %1174 = vrot.lane.b32.xlu0 %v981, 127
    %v1175 = vpop.permute.xlu0 %1174
    %v1176 = vsel %vm591, %v1173, %v1175
    %v1177 = vsel %vm591, %v1175, %v1173
    %s1178 = sld [smem:[#allocation12 + $0x14]]
    %v1179 = vstv %s1178
    %v1180 = vmul.f32 %v1179, %v1170
    %v1181 = vmul.f32 %v1179, %v1171
    %s1182 = sld [smem:[#allocation12 + $0x16]]
    %v1183 = vstv %s1182
    %v1184 = vmul.f32 %v1183, %v1176
    %v1185 = vmul.f32 %v1183, %v1177
    %v1186 = vadd.f32 %v1180, %v1184
    %v1187 = vadd.f32 %v1181, %v1185
    %v1188 = vmul.f32 %v1186, %v134
    %v1189 = vmul.f32 %v1187, %v135
    %v1190 = vadd.f32 %v1152, %v1188
    %v1191 = vadd.f32 %v1153, %v1189
    %s1192 = sld [smem:[#allocation12 + $0x15]]
    %v1193 = vstv %s1192
    %v1194 = vmul.f32 %v1193, %v1170
    %v1195 = vmul.f32 %v1193, %v1171
    %s1196 = sld [smem:[#allocation12 + $0x17]]
    %v1197 = vstv %s1196
    %v1198 = vmul.f32 %v1197, %v1176
    %v1199 = vmul.f32 %v1197, %v1177
    %v1200 = vadd.f32 %v1194, %v1198
    %v1201 = vadd.f32 %v1195, %v1199
    %v1202 = vmul.f32 %v1200, %v134
    %v1203 = vmul.f32 %v1201, %v135
    %v1204 = vadd.f32 %v1164, %v1202
    %v1205 = vadd.f32 %v1165, %v1203
    %1206 = vrot.lane.b32.xlu0 %v974, 113
    %v1207 = vpop.permute.xlu0 %1206
    %1208 = vrot.lane.b32.xlu0 %v975, 113
    %v1209 = vpop.permute.xlu0 %1208
    %v1210 = vsel %vm688, %v1207, %v1209
    %v1211 = vsel %vm688, %v1209, %v1207
    %1212 = vrot.lane.b32.xlu0 %v980, 113
    %v1213 = vpop.permute.xlu0 %1212
    %1214 = vrot.lane.b32.xlu0 %v981, 113
    %v1215 = vpop.permute.xlu0 %1214
    %v1216 = vsel %vm688, %v1213, %v1215
    %v1217 = vsel %vm688, %v1215, %v1213
    %s1218 = sld [smem:[#allocation12 + $0x18]]
    %v1219 = vstv %s1218
    %v1220 = vmul.f32 %v1219, %v1210
    %v1221 = vmul.f32 %v1219, %v1211
    %s1222 = sld [smem:[#allocation12 + $0x1a]]
    %v1223 = vstv %s1222
    %v1224 = vmul.f32 %v1223, %v1216
    %v1225 = vmul.f32 %v1223, %v1217
    %v1226 = vadd.f32 %v1220, %v1224
    %v1227 = vadd.f32 %v1221, %v1225
    %v1228 = vmul.f32 %v1226, %v136
    %v1229 = vmul.f32 %v1227, %v137
    %v1230 = vadd.f32 %v1190, %v1228
    %v1231 = vadd.f32 %v1191, %v1229
    %s1232 = sld [smem:[#allocation12 + $0x19]]
    %v1233 = vstv %s1232
    %v1234 = vmul.f32 %v1233, %v1210
    %v1235 = vmul.f32 %v1233, %v1211
    %s1236 = sld [smem:[#allocation12 + $0x1b]]
    %v1237 = vstv %s1236
    %v1238 = vmul.f32 %v1237, %v1216
    %v1239 = vmul.f32 %v1237, %v1217
    %v1240 = vadd.f32 %v1234, %v1238
    %v1241 = vadd.f32 %v1235, %v1239
    %v1242 = vmul.f32 %v1240, %v136
    %v1243 = vmul.f32 %v1241, %v137
    %v1244 = vadd.f32 %v1204, %v1242
    %v1245 = vadd.f32 %v1205, %v1243
    %1246 = vrot.lane.b32.xlu0 %v974, 112
    %v1247 = vpop.permute.xlu0 %1246
    %1248 = vrot.lane.b32.xlu0 %v975, 112
    %v1249 = vpop.permute.xlu0 %1248
    %v1250 = vsel %vm785, %v1247, %v1249
    %v1251 = vsel %vm785, %v1249, %v1247
    %1252 = vrot.lane.b32.xlu0 %v980, 112
    %v1253 = vpop.permute.xlu0 %1252
    %1254 = vrot.lane.b32.xlu0 %v981, 112
    %v1255 = vpop.permute.xlu0 %1254
    %v1256 = vsel %vm785, %v1253, %v1255
    %v1257 = vsel %vm785, %v1255, %v1253
    %s1258 = sld [smem:[#allocation12 + $0x1c]]
    %v1259 = vstv %s1258
    %v1260 = vmul.f32 %v1259, %v1250
    %v1261 = vmul.f32 %v1259, %v1251
    %s1262 = sld [smem:[#allocation12 + $0x1e]]
    %v1263 = vstv %s1262
    %v1264 = vmul.f32 %v1263, %v1256
    %v1265 = vmul.f32 %v1263, %v1257
    %v1266 = vadd.f32 %v1260, %v1264
    %v1267 = vadd.f32 %v1261, %v1265
    %v1268 = vmul.f32 %v1266, %v138
    %v1269 = vmul.f32 %v1267, %v139
    %v1270 = vadd.f32 %v1230, %v1268
    %v1271 = vadd.f32 %v1231, %v1269
    %s1272 = sld [smem:[#allocation12 + $0x1d]]
    %v1273 = vstv %s1272
    %v1274 = vmul.f32 %v1273, %v1250
    %v1275 = vmul.f32 %v1273, %v1251
    %s1276 = sld [smem:[#allocation12 + $0x1f]]
    %v1277 = vstv %s1276
    %v1278 = vmul.f32 %v1277, %v1256
    %v1279 = vmul.f32 %v1277, %v1257
    %v1280 = vadd.f32 %v1274, %v1278
    %v1281 = vadd.f32 %v1275, %v1279
    %v1282 = vmul.f32 %v1280, %v138
    %v1283 = vmul.f32 %v1281, %v139
    %v1284 = vadd.f32 %v1244, %v1282
    %v1285 = vadd.f32 %v1245, %v1283
    %1286 = vrot.lane.b32.xlu0 %v974, 111
    %v1287 = vpop.permute.xlu0 %1286
    %1288 = vrot.lane.b32.xlu0 %v975, 111
    %v1289 = vpop.permute.xlu0 %1288
    %v1290 = vsel %vm882, %v1287, %v1289
    %v1291 = vsel %vm882, %v1289, %v1287
    %1292 = vrot.lane.b32.xlu0 %v980, 111
    %v1293 = vpop.permute.xlu0 %1292
    %1294 = vrot.lane.b32.xlu0 %v981, 111
    %v1295 = vpop.permute.xlu0 %1294
    %v1296 = vsel %vm882, %v1293, %v1295
    %v1297 = vsel %vm882, %v1295, %v1293
    %s1298 = sld [smem:[#allocation12 + $0x20]]
    %v1299 = vstv %s1298
    %v1300 = vmul.f32 %v1299, %v1290
    %v1301 = vmul.f32 %v1299, %v1291
    %s1302 = sld [smem:[#allocation12 + $0x22]]
    %v1303 = vstv %s1302
    %v1304 = vmul.f32 %v1303, %v1296
    %v1305 = vmul.f32 %v1303, %v1297
    %v1306 = vadd.f32 %v1300, %v1304
    %v1307 = vadd.f32 %v1301, %v1305
    %v1308 = vmul.f32 %v1306, %v140
    %v1309 = vmul.f32 %v1307, %v141
    %v1310 = vadd.f32 %v1270, %v1308
    %v1311 = vadd.f32 %v1271, %v1309
    %s1312 = sld [smem:[#allocation12 + $0x21]]
    %v1313 = vstv %s1312
    %v1314 = vmul.f32 %v1313, %v1290
    %v1315 = vmul.f32 %v1313, %v1291
    %s1316 = sld [smem:[#allocation12 + $0x23]]
    %v1317 = vstv %s1316
    %v1318 = vmul.f32 %v1317, %v1296
    %v1319 = vmul.f32 %v1317, %v1297
    %v1320 = vadd.f32 %v1314, %v1318
    %v1321 = vadd.f32 %v1315, %v1319
    %v1322 = vmul.f32 %v1320, %v140
    %v1323 = vmul.f32 %v1321, %v141
    %v1324 = vadd.f32 %v1284, %v1322
    %v1325 = vadd.f32 %v1285, %v1323
    %s1326 = sld [smem:[#allocation13]]
    %v1327 = vstv %s1326
    %v1328 = vadd.f32 %v1310, %v1327
    %v1329 = vadd.f32 %v1311, %v1327
    %v1330 = vmax.f32 %v1328, 0.0
    %v1331 = vmax.f32 %v1329, 0.0
    %s1332 = sld [smem:[#allocation13 + $0x1]]
    %v1333 = vstv %s1332
    %v1334 = vadd.f32 %v1324, %v1333
    %v1335 = vadd.f32 %v1325, %v1333
    %v1336 = vmax.f32 %v1334, 0.0
    %v1337 = vmax.f32 %v1335, 0.0
    %s1338 = sld [smem:[#allocation15]]
    %v1339 = vstv %s1338
    %v1340 = vmul.f32 %v1339, %v1330
    %v1341 = vmul.f32 %v1339, %v1331
    %s1342 = sld [smem:[#allocation15 + $0x1]]
    %v1343 = vstv %s1342
    %v1344 = vmul.f32 %v1343, %v1336
    %v1345 = vmul.f32 %v1343, %v1337
    %v1346 = vadd.f32 %v1340, %v1344
    %v1347 = vadd.f32 %v1341, %v1345
    %s1348 = sld [smem:[#allocation2]]
    %v1349 = vstv %s1348
    %v1350 = vadd.f32 %v1346, %v1349
    %v1351 = vadd.f32 %v1347, %v1349
    %v1352 = vxor.u32 %v1350, 2147483648
    %v1353 = vxor.u32 %v1351, 2147483648
    %v1354 = vmul.f32 %v1352, 1.442695
    %v1355 = vpow.pop %v1354
    %v1356 = vmul.f32 %v1353, 1.442695
    %v1357 = vpow.pop %v1356
    %v1358 = vadd.f32 %v1355, 1.0
    %v1359 = vadd.f32 %v1357, 1.0
    %v1360 = vrcp.pop %v1358
    %v1361 = vmul.f32 %v1358, %v1360
    %v1362 = vsub.f32 1.0, %v1361
    %v1363 = vmul.f32 %v1360, %v1362
    %v1364 = vadd.f32 %v1360, %v1363
    %vm1365 = vweird.f32 %v1358
    %vm1366 = vweird.f32 %v1360
    %vm1367 = vmor %vm1365, %vm1366
    %v1368 = vsel %vm1367, %v1360, %v1364
    %v1369 = vand.u32 2147483647, %v1358
    %vm1370 = vcmp.eq.f32.partialorder %v1369, 8.507059e+37
    %v1371 = vand.u32 %v1358, 2147483648
    %v1372 = vor.u32 1.1754944e-38, %v1371
    %v1373 = vsel %vm1370, %v1372, %v1368
    %v1374 = vmul.f32 1.0, %v1373
    %v1375 = vrcp.pop %v1359
    %v1376 = vmul.f32 %v1359, %v1375
    %v1377 = vsub.f32 1.0, %v1376
    %v1378 = vmul.f32 %v1375, %v1377
    %v1379 = vadd.f32 %v1375, %v1378
    %vm1380 = vweird.f32 %v1359
    %vm1381 = vweird.f32 %v1375
    %vm1382 = vmor %vm1380, %vm1381
    %v1383 = vsel %vm1382, %v1375, %v1379
    %v1384 = vand.u32 2147483647, %v1359
    %vm1385 = vcmp.eq.f32.partialorder %v1384, 8.507059e+37
    %v1386 = vand.u32 %v1359, 2147483648
    %v1387 = vor.u32 1.1754944e-38, %v1386
    %v1388 = vsel %vm1385, %v1387, %v1383
    %v1389 = vmul.f32 1.0, %v1388
    %v1392 = vrot.slane %v1389, 6
    %vm1393 = vcmask 1041408
    %v1394 = vsel %vm1393, %v1374, %v1392
    %1396 = vst [vmem:[#allocation16] sm:$0xf] %v1394
    // Predicated region
    $region62: #{tpu_custom_call.1} parent=1 // pred_check
      _
    $region63: #{tpu_custom_call.1} parent=1 // pred_check_branch
      %1398 = sbr.rel (0) target = $region65
    $region64: #{tpu_custom_call.1} parent=1 // pred_region
      %1400 = vsyncadd [#allocation5], 0
      %s1402 = sshll.u32 [#allocation16], 4
      %s1403 = int_to_ptr.vmem [resolvable:$true] %s1402
      %s1404 = sshll.u32 %s8, 4
      %s1405 = int_to_ptr.hbm [resolvable:$true] %s1404
      %1407 = dma.vmem_to_hbm [thread:$0]  %s1403, 64, %s1405, [#allocation5]
    $region65: #{tpu_custom_call.1} parent=1 // pred_fallthru
      _
    // Predicated region
    $region66: #{tpu_custom_call.1} parent=1 // pred_check
      _
    $region67: #{tpu_custom_call.1} parent=1 // pred_check_branch
      %1409 = sbr.rel (0) target = $region69
    $region68: #{tpu_custom_call.1} parent=1 // pred_region
      %1411 = dma.done [#allocation5], 64
    $region69: #{tpu_custom_call.1} parent=1 // pred_fallthru
      _
    %1412 = vsyncpa [#allocation4], 1
    %1413 = vsyncpa [#allocation8], 1
    %1414 = vsyncpa [#allocation5], 1
    %1415 = vsyncpa [#allocation6], 1
    %1416 = vsyncpa [#allocation11], 1
    %1417 = vsyncpa [#allocation14], 1

</llo_original>
